<compile_context>
chip_gen: v6e
topology: v6e:2x2x1
jax: 0.10.0
libtpu: 0.0.40
codegen_flags: <defaults>
</compile_context>

<pallas_src>
import functools
import math

import jax
import jax.numpy as jnp
from jax.experimental import pallas as pl
from jax.experimental.pallas import tpu as pltpu

# MXU operand dtype (accumulation stays f32).  bf16 is MXU-native on v5e/v6e/v7x.
MXU_DTYPE = jnp.bfloat16


def _round_up(x, m):
    return ((x + m - 1) // m) * m


# ----------------------------- fused Pallas kernel ---------------------------------


def _fused_critic_kernel(*args, num_layers):
    """args = (state_ref, action_ref, *layer_param_refs, out_ref).

    Layer param refs (per head, head selected by grid axis 0):
      layer 0 : wmu_s, wsig_s, wmu_a, wsig_a, ein_s, ein_a, eout, bias   (8 refs)
      layer l : wmu, wsig, ein, eout, bias                               (5 refs)
    Weights are pre-transposed to (in, out); ein is (1, in), eout/bias are (1, out).
    """
    state_ref, action_ref = args[0], args[1]
    out_ref = args[-1]
    p = list(args[2:-1])

    def noisy_mm(x, wmu_ref, wsig_ref, ein_ref, eout_ref):
        # y = x @ Wmu + ((x * eps_in) @ Wsig) * eps_out      (rank-1 noisy-weight form)
        xm = x.astype(MXU_DTYPE)
        xs = (x * ein_ref[...]).astype(MXU_DTYPE)          # f32 VPU scale, then bf16 cast
        y = jnp.dot(xm, wmu_ref[...], preferred_element_type=jnp.float32)
        y = y + jnp.dot(xs, wsig_ref[...],
                        preferred_element_type=jnp.float32) * eout_ref[...]
        return y

    # ---- layer 0: concat avoided — state slab + action slab summed on the MXU ----
    wmu_s, wsig_s, wmu_a, wsig_a, ein_s, ein_a, eout0, b0 = p[:8]
    idx = 8
    x_s = state_ref[...]
    x_a = action_ref[...]
    y = (noisy_mm(x_s, wmu_s, wsig_s, ein_s, eout0)
         + noisy_mm(x_a, wmu_a, wsig_a, ein_a, eout0)
         + b0[...])
    if num_layers > 1:
        y = jnp.maximum(y, 0.0)

    # ---- remaining layers (unrolled at trace time; activations stay in VMEM/vregs) ----
    for l in range(1, num_layers):
        wmu, wsig, ein, eout, b = p[idx:idx + 5]
        idx += 5
        y = noisy_mm(y, wmu, wsig, ein, eout) + b[...]
        if l < num_layers - 1:
            y = jnp.maximum(y, 0.0)

    head = pl.program_id(0)

    @pl.when(head == 0)
    def _():
        out_ref[...] = y                                     # mean head: identity

    @pl.when(head == 1)
    def _():
        # std head: numerically-stable softplus(y) + 1e-6 (EUP exp; VPU f32 math).
        # TODO(synk): jnp.log1p would be marginally more accurate for large |y|.
        sp = jnp.maximum(y, 0.0) + jnp.log(1.0 + jnp.exp(-jnp.abs(y)))
        out_ref[...] = sp + 1e-6


# ------------------------- raw parameter init (reset_parameters / reset_noise) -----


def _scale_noise(key, size):
    # x.sign() * sqrt(|x|) with x ~ N(0, 1)
    x = jax.random.normal(key, (size,), dtype=jnp.float32)
    return jnp.sign(x) * jnp.sqrt(jnp.abs(x))


def init_noisy_linear_params(key, in_features, out_features, sigma_init=0.5):
    """NoisyLinear.reset_parameters() + reset_noise(); weight_epsilon kept factored."""
    std = 1.0 / math.sqrt(in_features)
    k_wmu, k_bmu, k_ein, k_eout = jax.random.split(key, 4)
    return dict(
        weight_mu=jax.random.uniform(k_wmu, (out_features, in_features),
                                     minval=-std, maxval=std, dtype=jnp.float32),
        weight_sigma=jnp.full((out_features, in_features), sigma_init * std, jnp.float32),
        bias_mu=jax.random.uniform(k_bmu, (out_features,),
                                   minval=-std, maxval=std, dtype=jnp.float32),
        bias_sigma=jnp.full((out_features,), sigma_init * std, jnp.float32),
        eps_in=_scale_noise(k_ein, in_features),     # weight_epsilon = outer(eps_out, eps_in)
        eps_out=_scale_noise(k_eout, out_features),  # bias_epsilon   = eps_out
    )


def init_mlp_params(key, input_size, hidden_sizes, output_size, sigma_init=0.5):
    # TODO(synk): MLPConfig is data-driven in the original repo; a representative
    # NoisyLinear->ReLU->...->NoisyLinear stack is instantiated here.
    sizes = [input_size] + list(hidden_sizes) + [output_size]
    keys = jax.random.split(key, len(sizes) - 1)
    return [init_noisy_linear_params(k, sizes[i], sizes[i + 1], sigma_init)
            for i, k in enumerate(keys)]


# ---------------- one-time layout prep (transpose / pad / fold bias / stack heads) -----


def prepare_fused_critic_params(mean_params, std_params, state_dim, action_dim):
    """Done once at init / reset_noise time — the forward pass does zero param prep."""
    f32 = jnp.float32
    assert len(mean_params) == len(std_params)
    num_layers = len(mean_params)

    Sp = _round_up(state_dim, 128)
    Ap = _round_up(action_dim, 128)

    def pad2(a, r, c):
        return jnp.pad(a, ((0, r - a.shape[0]), (0, c - a.shape[1])))

    def row(v, c):  # (n,) -> (1, c) zero-padded f32 row
        return pad2(v.reshape(1, -1).astype(f32), 1, c)

    def prep_layer(p, split_first):
        in_f, out_f = p["weight_mu"].shape[1], p["weight_mu"].shape[0]
        Np = _round_up(out_f, 128)
        wmu_t = p["weight_mu"].T.astype(f32)       # (in, out)
        wsig_t = p["weight_sigma"].T.astype(f32)   # (in, out)
        eout = row(p["eps_out"], Np)
        bias = row((p["bias_mu"] + p["bias_sigma"] * p["eps_out"]), Np)  # folded bias
        if split_first:
            assert in_f == state_dim + action_dim
            arrs = [
                pad2(wmu_t[:state_dim], Sp, Np).astype(MXU_DTYPE),
                pad2(wsig_t[:state_dim], Sp, Np).astype(MXU_DTYPE),
                pad2(wmu_t[state_dim:], Ap, Np).astype(MXU_DTYPE),
                pad2(wsig_t[state_dim:], Ap, Np).astype(MXU_DTYPE),
                row(p["eps_in"][:state_dim], Sp),
                row(p["eps_in"][state_dim:], Ap),
                eout, bias,
            ]
        else:
            Kp = _round_up(in_f, 128)
            arrs = [
                pad2(wmu_t, Kp, Np).astype(MXU_DTYPE),
                pad2(wsig_t, Kp, Np).astype(MXU_DTYPE),
                row(p["eps_in"], Kp),
                eout, bias,
            ]
        return arrs, out_f, Np

    arrays = []
    out_f = Np_last = None
    for l in range(num_layers):
        m_arrs, out_f, Np_last = prep_layer(mean_params[l], l == 0)
        s_arrs, _, _ = prep_layer(std_params[l], l == 0)
        for ma, sa in zip(m_arrs, s_arrs):
            arrays.append(jnp.stack([ma, sa], axis=0))   # (2, ...) — head-stacked

    return dict(arrays=arrays, num_layers=num_layers,
                Sp=Sp, Ap=Ap, out_features=out_f, Np_last=Np_last)


# ------------------------------ critic forward --------------------------------


def continuous_distributed_critic_forward(state, action, fused):
    """mean, std = critic(state, action) — single fused pallas_call."""
    f32 = jnp.float32
    B = state.shape[0]
    Bp = _round_up(max(B, 8), 8)          # whole batch is one block (fine up to ~thousands)
    Sp, Ap = fused["Sp"], fused["Ap"]
    Np_last = fused["Np_last"]
    arrays = fused["arrays"]

    # Only per-forward layout work: pad the runtime inputs; slice the result once at the end.
    state_p = jnp.pad(state.astype(f32), ((0, Bp - B), (0, Sp - state.shape[1])))
    action_p = jnp.pad(action.astype(f32), ((0, Bp - B), (0, Ap - action.shape[1])))

    in_specs = [
        pl.BlockSpec((Bp, Sp), lambda h: (0, 0)),           # state (shared by both heads)
        pl.BlockSpec((Bp, Ap), lambda h: (0, 0)),           # action
    ]
    for a in arrays:
        # leading head dim squeezed; block covers the full padded (rows, cols) slab
        in_specs.append(pl.BlockSpec((None,) + a.shape[1:], lambda h: (h, 0, 0)))

    kernel = functools.partial(_fused_critic_kernel, num_layers=fused["num_layers"])

    out = pl.pallas_call(
        kernel,
        out_shape=jax.ShapeDtypeStruct((2, Bp, Np_last), f32),
        grid_spec=pltpu.PrefetchScalarGridSpec(
            num_scalar_prefetch=0,
            grid=(2,),                                      # head axis: mean=0, std=1
            in_specs=in_specs,
            out_specs=pl.BlockSpec((None, Bp, Np_last), lambda h: (h, 0, 0)),
        ),
        compiler_params=pltpu.CompilerParams(
            dimension_semantics=("parallel",)),             # v7x: one head per TensorCore
    )(state_p, action_p, *arrays)

    mean = out[0, :B, :fused["out_features"]]
    std = out[1, :B, :fused["out_features"]]
    return mean, std


# ------------------------------ reference + test -------------------------------


def _noisy_linear_ref(x, p):
    w = p["weight_mu"] + p["weight_sigma"] * jnp.outer(p["eps_out"], p["eps_in"])
    b = p["bias_mu"] + p["bias_sigma"] * p["eps_out"]
    return jnp.matmul(x, w.T, precision=jax.lax.Precision.HIGHEST) + b


def _critic_ref(state, action, mean_params, std_params):
    h = jnp.concatenate([state, action], axis=1)
    m = h
    for i, p in enumerate(mean_params):
        m = _noisy_linear_ref(m, p)
        if i < len(mean_params) - 1:
            m = jnp.maximum(m, 0.0)
    s = h
    for i, p in enumerate(std_params):
        s = _noisy_linear_ref(s, p)
        if i < len(std_params) - 1:
            s = jnp.maximum(s, 0.0)
    s = jnp.maximum(s, 0.0) + jnp.log(1.0 + jnp.exp(-jnp.abs(s))) + 1e-6
    return m, s


if __name__ == "__main__":
    key = jax.random.PRNGKey(0)
    k_mean, k_std, k_state, k_action = jax.random.split(key, 4)

    batch, state_dim, action_dim, hidden, out_dim = 2, 24, 8, 32, 1
    input_size = state_dim + action_dim

    mean_params = init_mlp_params(k_mean, input_size, (hidden, hidden), out_dim)
    std_params = init_mlp_params(k_std, input_size, (hidden, hidden), out_dim)

    # One-time layout work (would be redone on reset_noise()).
    fused = prepare_fused_critic_params(mean_params, std_params, state_dim, action_dim)

    state = jax.random.normal(k_state, (batch, state_dim), dtype=jnp.float32)
    action = jax.random.normal(k_action, (batch, action_dim), dtype=jnp.float32)

    mean, std = continuous_distributed_critic_forward(state, action, fused)
    mean = jax.block_until_ready(mean)
    std = jax.block_until_ready(std)

    mean_ref, std_ref = _critic_ref(state, action, mean_params, std_params)

    assert mean.shape == (batch, out_dim) and std.shape == (batch, out_dim)
    # bf16 MXU operands (f32 accumulation) -> compare against the HIGHEST-precision
    # f32 reference at a slightly looser tolerance, per review guidance.
    assert jnp.allclose(mean, mean_ref, atol=3e-2, rtol=3e-2), (mean, mean_ref)
    assert jnp.allclose(std, std_ref, atol=3e-2, rtol=3e-2), (std, std_ref)
    assert bool(jnp.all(std > 0.0))

    print("KERNEL_OK")
</pallas_src>

<mosaic_0001>
module attributes {stable_mosaic.version = 11 : i64} {
  func.func @_fused_critic_kernel(%arg0: i32, %arg1: memref<8x128xf32, #tpu.memory_space<vmem>>, %arg2: memref<8x128xf32, #tpu.memory_space<vmem>>, %arg3: memref<1x128x128xbf16, #tpu.memory_space<vmem>>, %arg4: memref<1x128x128xbf16, #tpu.memory_space<vmem>>, %arg5: memref<1x128x128xbf16, #tpu.memory_space<vmem>>, %arg6: memref<1x128x128xbf16, #tpu.memory_space<vmem>>, %arg7: memref<1x1x128xf32, #tpu.memory_space<vmem>>, %arg8: memref<1x1x128xf32, #tpu.memory_space<vmem>>, %arg9: memref<1x1x128xf32, #tpu.memory_space<vmem>>, %arg10: memref<1x1x128xf32, #tpu.memory_space<vmem>>, %arg11: memref<1x128x128xbf16, #tpu.memory_space<vmem>>, %arg12: memref<1x128x128xbf16, #tpu.memory_space<vmem>>, %arg13: memref<1x1x128xf32, #tpu.memory_space<vmem>>, %arg14: memref<1x1x128xf32, #tpu.memory_space<vmem>>, %arg15: memref<1x1x128xf32, #tpu.memory_space<vmem>>, %arg16: memref<1x128x128xbf16, #tpu.memory_space<vmem>>, %arg17: memref<1x128x128xbf16, #tpu.memory_space<vmem>>, %arg18: memref<1x1x128xf32, #tpu.memory_space<vmem>>, %arg19: memref<1x1x128xf32, #tpu.memory_space<vmem>>, %arg20: memref<1x1x128xf32, #tpu.memory_space<vmem>>, %arg21: memref<1x8x128xf32, #tpu.memory_space<vmem>>) attributes {dimension_semantics = [#tpu.dimension_semantics<parallel>], iteration_bounds = array<i64: 2>, scalar_prefetch = 0 : i64, scratch_operands = 0 : i64, tpu.core_type = #tpu.core_type<tc>, window_params = [{pipeline_mode = #tpu.pipeline_mode<synchronous>, transform_indices = @transform_0, window_bounds = array<i64: 8, 128>}, {pipeline_mode = #tpu.pipeline_mode<synchronous>, transform_indices = @transform_1, window_bounds = array<i64: 8, 128>}, {transform_indices = @transform_2, window_bounds = array<i64: 1, 128, 128>}, {transform_indices = @transform_3, window_bounds = array<i64: 1, 128, 128>}, {transform_indices = @transform_4, window_bounds = array<i64: 1, 128, 128>}, {transform_indices = @transform_5, window_bounds = array<i64: 1, 128, 128>}, {transform_indices = @transform_6, window_bounds = array<i64: 1, 1, 128>}, {transform_indices = @transform_7, window_bounds = array<i64: 1, 1, 128>}, {transform_indices = @transform_8, window_bounds = array<i64: 1, 1, 128>}, {transform_indices = @transform_9, window_bounds = array<i64: 1, 1, 128>}, {transform_indices = @transform_10, window_bounds = array<i64: 1, 128, 128>}, {transform_indices = @transform_11, window_bounds = array<i64: 1, 128, 128>}, {transform_indices = @transform_12, window_bounds = array<i64: 1, 1, 128>}, {transform_indices = @transform_13, window_bounds = array<i64: 1, 1, 128>}, {transform_indices = @transform_14, window_bounds = array<i64: 1, 1, 128>}, {transform_indices = @transform_15, window_bounds = array<i64: 1, 128, 128>}, {transform_indices = @transform_16, window_bounds = array<i64: 1, 128, 128>}, {transform_indices = @transform_17, window_bounds = array<i64: 1, 1, 128>}, {transform_indices = @transform_18, window_bounds = array<i64: 1, 1, 128>}, {transform_indices = @transform_19, window_bounds = array<i64: 1, 1, 128>}, {transform_indices = @transform_20, window_bounds = array<i64: 1, 8, 128>}]} {
    %c0 = arith.constant 0 : index
    %c0_0 = arith.constant 0 : index
    %0 = vector.load %arg1[%c0, %c0_0] : memref<8x128xf32, #tpu.memory_space<vmem>>, vector<8x128xf32>
    %c0_1 = arith.constant 0 : index
    %c0_2 = arith.constant 0 : index
    %1 = vector.load %arg2[%c0_1, %c0_2] : memref<8x128xf32, #tpu.memory_space<vmem>>, vector<8x128xf32>
    %2 = arith.truncf %0 : vector<8x128xf32> to vector<8x128xbf16>
    %c0_3 = arith.constant 0 : index
    %c0_4 = arith.constant 0 : index
    %c0_5 = arith.constant 0 : index
    %3 = vector.load %arg7[%c0_3, %c0_4, %c0_5] : memref<1x1x128xf32, #tpu.memory_space<vmem>>, vector<1x1x128xf32>
    %4 = vector.shape_cast %3 : vector<1x1x128xf32> to vector<1x128xf32>
    %5 = vector.broadcast %4 : vector<1x128xf32> to vector<8x128xf32>
    %6 = arith.mulf %0, %5 : vector<8x128xf32>
    %7 = arith.truncf %6 : vector<8x128xf32> to vector<8x128xbf16>
    %c0_6 = arith.constant 0 : index
    %c0_7 = arith.constant 0 : index
    %c0_8 = arith.constant 0 : index
    %8 = vector.load %arg3[%c0_6, %c0_7, %c0_8] : memref<1x128x128xbf16, #tpu.memory_space<vmem>>, vector<1x128x128xbf16>
    %9 = vector.shape_cast %8 : vector<1x128x128xbf16> to vector<128x128xbf16>
    %cst = arith.constant dense<0.000000e+00> : vector<8x128xf32>
    %10 = tpu.matmul %2, %9, %cst {dimension_numbers = #tpu.dot_dimension_numbers<[1], [0], [0], [1], [0, 0, 1, 1], [], []>} : vector<8x128xbf16>, vector<128x128xbf16>, vector<8x128xf32> -> vector<8x128xf32>
    %c0_9 = arith.constant 0 : index
    %c0_10 = arith.constant 0 : index
    %c0_11 = arith.constant 0 : index
    %11 = vector.load %arg4[%c0_9, %c0_10, %c0_11] : memref<1x128x128xbf16, #tpu.memory_space<vmem>>, vector<1x128x128xbf16>
    %12 = vector.shape_cast %11 : vector<1x128x128xbf16> to vector<128x128xbf16>
    %cst_12 = arith.constant dense<0.000000e+00> : vector<8x128xf32>
    %13 = tpu.matmul %7, %12, %cst_12 {dimension_numbers = #tpu.dot_dimension_numbers<[1], [0], [0], [1], [0, 0, 1, 1], [], []>} : vector<8x128xbf16>, vector<128x128xbf16>, vector<8x128xf32> -> vector<8x128xf32>
    %c0_13 = arith.constant 0 : index
    %c0_14 = arith.constant 0 : index
    %c0_15 = arith.constant 0 : index
    %14 = vector.load %arg9[%c0_13, %c0_14, %c0_15] : memref<1x1x128xf32, #tpu.memory_space<vmem>>, vector<1x1x128xf32>
    %15 = vector.shape_cast %14 : vector<1x1x128xf32> to vector<1x128xf32>
    %16 = vector.broadcast %15 : vector<1x128xf32> to vector<8x128xf32>
    %17 = arith.mulf %13, %16 : vector<8x128xf32>
    %18 = arith.addf %10, %17 : vector<8x128xf32>
    %19 = arith.truncf %1 : vector<8x128xf32> to vector<8x128xbf16>
    %c0_16 = arith.constant 0 : index
    %c0_17 = arith.constant 0 : index
    %c0_18 = arith.constant 0 : index
    %20 = vector.load %arg8[%c0_16, %c0_17, %c0_18] : memref<1x1x128xf32, #tpu.memory_space<vmem>>, vector<1x1x128xf32>
    %21 = vector.shape_cast %20 : vector<1x1x128xf32> to vector<1x128xf32>
    %22 = vector.broadcast %21 : vector<1x128xf32> to vector<8x128xf32>
    %23 = arith.mulf %1, %22 : vector<8x128xf32>
    %24 = arith.truncf %23 : vector<8x128xf32> to vector<8x128xbf16>
    %c0_19 = arith.constant 0 : index
    %c0_20 = arith.constant 0 : index
    %c0_21 = arith.constant 0 : index
    %25 = vector.load %arg5[%c0_19, %c0_20, %c0_21] : memref<1x128x128xbf16, #tpu.memory_space<vmem>>, vector<1x128x128xbf16>
    %26 = vector.shape_cast %25 : vector<1x128x128xbf16> to vector<128x128xbf16>
    %cst_22 = arith.constant dense<0.000000e+00> : vector<8x128xf32>
    %27 = tpu.matmul %19, %26, %cst_22 {dimension_numbers = #tpu.dot_dimension_numbers<[1], [0], [0], [1], [0, 0, 1, 1], [], []>} : vector<8x128xbf16>, vector<128x128xbf16>, vector<8x128xf32> -> vector<8x128xf32>
    %c0_23 = arith.constant 0 : index
    %c0_24 = arith.constant 0 : index
    %c0_25 = arith.constant 0 : index
    %28 = vector.load %arg6[%c0_23, %c0_24, %c0_25] : memref<1x128x128xbf16, #tpu.memory_space<vmem>>, vector<1x128x128xbf16>
    %29 = vector.shape_cast %28 : vector<1x128x128xbf16> to vector<128x128xbf16>
    %cst_26 = arith.constant dense<0.000000e+00> : vector<8x128xf32>
    %30 = tpu.matmul %24, %29, %cst_26 {dimension_numbers = #tpu.dot_dimension_numbers<[1], [0], [0], [1], [0, 0, 1, 1], [], []>} : vector<8x128xbf16>, vector<128x128xbf16>, vector<8x128xf32> -> vector<8x128xf32>
    %c0_27 = arith.constant 0 : index
    %c0_28 = arith.constant 0 : index
    %c0_29 = arith.constant 0 : index
    %31 = vector.load %arg9[%c0_27, %c0_28, %c0_29] : memref<1x1x128xf32, #tpu.memory_space<vmem>>, vector<1x1x128xf32>
    %32 = vector.shape_cast %31 : vector<1x1x128xf32> to vector<1x128xf32>
    %33 = vector.broadcast %32 : vector<1x128xf32> to vector<8x128xf32>
    %34 = arith.mulf %30, %33 : vector<8x128xf32>
    %35 = arith.addf %27, %34 : vector<8x128xf32>
    %36 = arith.addf %18, %35 : vector<8x128xf32>
    %c0_30 = arith.constant 0 : index
    %c0_31 = arith.constant 0 : index
    %c0_32 = arith.constant 0 : index
    %37 = vector.load %arg10[%c0_30, %c0_31, %c0_32] : memref<1x1x128xf32, #tpu.memory_space<vmem>>, vector<1x1x128xf32>
    %38 = vector.shape_cast %37 : vector<1x1x128xf32> to vector<1x128xf32>
    %39 = vector.broadcast %38 : vector<1x128xf32> to vector<8x128xf32>
    %40 = arith.addf %36, %39 : vector<8x128xf32>
    %cst_33 = arith.constant 0.000000e+00 : f32
    %41 = vector.broadcast %cst_33 : f32 to vector<8x128xf32>
    %42 = arith.maximumf %40, %41 : vector<8x128xf32>
    %43 = arith.truncf %42 : vector<8x128xf32> to vector<8x128xbf16>
    %c0_34 = arith.constant 0 : index
    %c0_35 = arith.constant 0 : index
    %c0_36 = arith.constant 0 : index
    %44 = vector.load %arg13[%c0_34, %c0_35, %c0_36] : memref<1x1x128xf32, #tpu.memory_space<vmem>>, vector<1x1x128xf32>
    %45 = vector.shape_cast %44 : vector<1x1x128xf32> to vector<1x128xf32>
    %46 = vector.broadcast %45 : vector<1x128xf32> to vector<8x128xf32>
    %47 = arith.mulf %42, %46 : vector<8x128xf32>
    %48 = arith.truncf %47 : vector<8x128xf32> to vector<8x128xbf16>
    %c0_37 = arith.constant 0 : index
    %c0_38 = arith.constant 0 : index
    %c0_39 = arith.constant 0 : index
    %49 = vector.load %arg11[%c0_37, %c0_38, %c0_39] : memref<1x128x128xbf16, #tpu.memory_space<vmem>>, vector<1x128x128xbf16>
    %50 = vector.shape_cast %49 : vector<1x128x128xbf16> to vector<128x128xbf16>
    %cst_40 = arith.constant dense<0.000000e+00> : vector<8x128xf32>
    %51 = tpu.matmul %43, %50, %cst_40 {dimension_numbers = #tpu.dot_dimension_numbers<[1], [0], [0], [1], [0, 0, 1, 1], [], []>} : vector<8x128xbf16>, vector<128x128xbf16>, vector<8x128xf32> -> vector<8x128xf32>
    %c0_41 = arith.constant 0 : index
    %c0_42 = arith.constant 0 : index
    %c0_43 = arith.constant 0 : index
    %52 = vector.load %arg12[%c0_41, %c0_42, %c0_43] : memref<1x128x128xbf16, #tpu.memory_space<vmem>>, vector<1x128x128xbf16>
    %53 = vector.shape_cast %52 : vector<1x128x128xbf16> to vector<128x128xbf16>
    %cst_44 = arith.constant dense<0.000000e+00> : vector<8x128xf32>
    %54 = tpu.matmul %48, %53, %cst_44 {dimension_numbers = #tpu.dot_dimension_numbers<[1], [0], [0], [1], [0, 0, 1, 1], [], []>} : vector<8x128xbf16>, vector<128x128xbf16>, vector<8x128xf32> -> vector<8x128xf32>
    %c0_45 = arith.constant 0 : index
    %c0_46 = arith.constant 0 : index
    %c0_47 = arith.constant 0 : index
    %55 = vector.load %arg14[%c0_45, %c0_46, %c0_47] : memref<1x1x128xf32, #tpu.memory_space<vmem>>, vector<1x1x128xf32>
    %56 = vector.shape_cast %55 : vector<1x1x128xf32> to vector<1x128xf32>
    %57 = vector.broadcast %56 : vector<1x128xf32> to vector<8x128xf32>
    %58 = arith.mulf %54, %57 : vector<8x128xf32>
    %59 = arith.addf %51, %58 : vector<8x128xf32>
    %c0_48 = arith.constant 0 : index
    %c0_49 = arith.constant 0 : index
    %c0_50 = arith.constant 0 : index
    %60 = vector.load %arg15[%c0_48, %c0_49, %c0_50] : memref<1x1x128xf32, #tpu.memory_space<vmem>>, vector<1x1x128xf32>
    %61 = vector.shape_cast %60 : vector<1x1x128xf32> to vector<1x128xf32>
    %62 = vector.broadcast %61 : vector<1x128xf32> to vector<8x128xf32>
    %63 = arith.addf %59, %62 : vector<8x128xf32>
    %cst_51 = arith.constant 0.000000e+00 : f32
    %64 = vector.broadcast %cst_51 : f32 to vector<8x128xf32>
    %65 = arith.maximumf %63, %64 : vector<8x128xf32>
    %66 = arith.truncf %65 : vector<8x128xf32> to vector<8x128xbf16>
    %c0_52 = arith.constant 0 : index
    %c0_53 = arith.constant 0 : index
    %c0_54 = arith.constant 0 : index
    %67 = vector.load %arg18[%c0_52, %c0_53, %c0_54] : memref<1x1x128xf32, #tpu.memory_space<vmem>>, vector<1x1x128xf32>
    %68 = vector.shape_cast %67 : vector<1x1x128xf32> to vector<1x128xf32>
    %69 = vector.broadcast %68 : vector<1x128xf32> to vector<8x128xf32>
    %70 = arith.mulf %65, %69 : vector<8x128xf32>
    %71 = arith.truncf %70 : vector<8x128xf32> to vector<8x128xbf16>
    %c0_55 = arith.constant 0 : index
    %c0_56 = arith.constant 0 : index
    %c0_57 = arith.constant 0 : index
    %72 = vector.load %arg16[%c0_55, %c0_56, %c0_57] : memref<1x128x128xbf16, #tpu.memory_space<vmem>>, vector<1x128x128xbf16>
    %73 = vector.shape_cast %72 : vector<1x128x128xbf16> to vector<128x128xbf16>
    %cst_58 = arith.constant dense<0.000000e+00> : vector<8x128xf32>
    %74 = tpu.matmul %66, %73, %cst_58 {dimension_numbers = #tpu.dot_dimension_numbers<[1], [0], [0], [1], [0, 0, 1, 1], [], []>} : vector<8x128xbf16>, vector<128x128xbf16>, vector<8x128xf32> -> vector<8x128xf32>
    %c0_59 = arith.constant 0 : index
    %c0_60 = arith.constant 0 : index
    %c0_61 = arith.constant 0 : index
    %75 = vector.load %arg17[%c0_59, %c0_60, %c0_61] : memref<1x128x128xbf16, #tpu.memory_space<vmem>>, vector<1x128x128xbf16>
    %76 = vector.shape_cast %75 : vector<1x128x128xbf16> to vector<128x128xbf16>
    %cst_62 = arith.constant dense<0.000000e+00> : vector<8x128xf32>
    %77 = tpu.matmul %71, %76, %cst_62 {dimension_numbers = #tpu.dot_dimension_numbers<[1], [0], [0], [1], [0, 0, 1, 1], [], []>} : vector<8x128xbf16>, vector<128x128xbf16>, vector<8x128xf32> -> vector<8x128xf32>
    %c0_63 = arith.constant 0 : index
    %c0_64 = arith.constant 0 : index
    %c0_65 = arith.constant 0 : index
    %78 = vector.load %arg19[%c0_63, %c0_64, %c0_65] : memref<1x1x128xf32, #tpu.memory_space<vmem>>, vector<1x1x128xf32>
    %79 = vector.shape_cast %78 : vector<1x1x128xf32> to vector<1x128xf32>
    %80 = vector.broadcast %79 : vector<1x128xf32> to vector<8x128xf32>
    %81 = arith.mulf %77, %80 : vector<8x128xf32>
    %82 = arith.addf %74, %81 : vector<8x128xf32>
    %c0_66 = arith.constant 0 : index
    %c0_67 = arith.constant 0 : index
    %c0_68 = arith.constant 0 : index
    %83 = vector.load %arg20[%c0_66, %c0_67, %c0_68] : memref<1x1x128xf32, #tpu.memory_space<vmem>>, vector<1x1x128xf32>
    %84 = vector.shape_cast %83 : vector<1x1x128xf32> to vector<1x128xf32>
    %85 = vector.broadcast %84 : vector<1x128xf32> to vector<8x128xf32>
    %86 = arith.addf %82, %85 : vector<8x128xf32>
    %c0_i32 = arith.constant 0 : i32
    %87 = arith.cmpi eq, %arg0, %c0_i32 : i32
    %88 = arith.extui %87 : i1 to i32
    %c0_i32_69 = arith.constant 0 : i32
    %89 = arith.cmpi ne, %88, %c0_i32_69 : i32
    scf.if %89 {
      %c0_71 = arith.constant 0 : index
      %c0_72 = arith.constant 0 : index
      %c0_73 = arith.constant 0 : index
      %93 = vector.load %arg21[%c0_71, %c0_72, %c0_73] : memref<1x8x128xf32, #tpu.memory_space<vmem>>, vector<1x8x128xf32>
      %94 = vector.shape_cast %93 : vector<1x8x128xf32> to vector<8x128xf32>
      %95 = vector.shape_cast %86 : vector<8x128xf32> to vector<1x8x128xf32>
      tpu.vector_store %arg21[%c0_71, %c0_72, %c0_73], %95 {strides = array<i32>} : memref<1x8x128xf32, #tpu.memory_space<vmem>>, vector<1x8x128xf32>,
    } else {
    }
    %c1_i32 = arith.constant 1 : i32
    %90 = arith.cmpi eq, %arg0, %c1_i32 : i32
    %91 = arith.extui %90 : i1 to i32
    %c0_i32_70 = arith.constant 0 : i32
    %92 = arith.cmpi ne, %91, %c0_i32_70 : i32
    scf.if %92 {
      %cst_71 = arith.constant 0.000000e+00 : f32
      %93 = vector.broadcast %cst_71 : f32 to vector<8x128xf32>
      %94 = arith.maximumf %86, %93 : vector<8x128xf32>
      %95 = math.absf %86 : vector<8x128xf32>
      %cst_72 = arith.constant 0.000000e+00 : f32
      %96 = vector.broadcast %cst_72 : f32 to vector<8x128xf32>
      %97 = arith.subf %96, %95 : vector<8x128xf32>
      %98 = math.exp %97 : vector<8x128xf32>
      %cst_73 = arith.constant 1.000000e+00 : f32
      %99 = vector.broadcast %cst_73 : f32 to vector<8x128xf32>
      %100 = arith.addf %99, %98 : vector<8x128xf32>
      %101 = math.log %100 : vector<8x128xf32>
      %102 = arith.addf %94, %101 : vector<8x128xf32>
      %cst_74 = arith.constant 9.99999997E-7 : f32
      %103 = vector.broadcast %cst_74 : f32 to vector<8x128xf32>
      %104 = arith.addf %102, %103 : vector<8x128xf32>
      %c0_75 = arith.constant 0 : index
      %c0_76 = arith.constant 0 : index
      %c0_77 = arith.constant 0 : index
      %105 = vector.load %arg21[%c0_75, %c0_76, %c0_77] : memref<1x8x128xf32, #tpu.memory_space<vmem>>, vector<1x8x128xf32>
      %106 = vector.shape_cast %105 : vector<1x8x128xf32> to vector<8x128xf32>
      %107 = vector.shape_cast %104 : vector<8x128xf32> to vector<1x8x128xf32>
      tpu.vector_store %arg21[%c0_75, %c0_76, %c0_77], %107 {strides = array<i32>} : memref<1x8x128xf32, #tpu.memory_space<vmem>>, vector<1x8x128xf32>,
    } else {
    }
    return
  }
  func.func @transform_0(%arg0: i32) -> (i32, i32) {
    %c0_i32 = arith.constant 0 : i32
    %c0_i32_0 = arith.constant 0 : i32
    %c0_i32_1 = arith.constant 0 : i32
    return %c0_i32, %c0_i32_0 : i32, i32
  }
  func.func @transform_1(%arg0: i32) -> (i32, i32) {
    %c0_i32 = arith.constant 0 : i32
    %c0_i32_0 = arith.constant 0 : i32
    %c0_i32_1 = arith.constant 0 : i32
    return %c0_i32, %c0_i32_0 : i32, i32
  }
  func.func @transform_2(%arg0: i32) -> (i32, i32, i32) {
    %c0_i32 = arith.constant 0 : i32
    %c0_i32_0 = arith.constant 0 : i32
    %c0_i32_1 = arith.constant 0 : i32
    return %arg0, %c0_i32, %c0_i32_0 : i32, i32, i32
  }
  func.func @transform_3(%arg0: i32) -> (i32, i32, i32) {
    %c0_i32 = arith.constant 0 : i32
    %c0_i32_0 = arith.constant 0 : i32
    %c0_i32_1 = arith.constant 0 : i32
    return %arg0, %c0_i32, %c0_i32_0 : i32, i32, i32
  }
  func.func @transform_4(%arg0: i32) -> (i32, i32, i32) {
    %c0_i32 = arith.constant 0 : i32
    %c0_i32_0 = arith.constant 0 : i32
    %c0_i32_1 = arith.constant 0 : i32
    return %arg0, %c0_i32, %c0_i32_0 : i32, i32, i32
  }
  func.func @transform_5(%arg0: i32) -> (i32, i32, i32) {
    %c0_i32 = arith.constant 0 : i32
    %c0_i32_0 = arith.constant 0 : i32
    %c0_i32_1 = arith.constant 0 : i32
    return %arg0, %c0_i32, %c0_i32_0 : i32, i32, i32
  }
  func.func @transform_6(%arg0: i32) -> (i32, i32, i32) {
    %c0_i32 = arith.constant 0 : i32
    %c0_i32_0 = arith.constant 0 : i32
    %c0_i32_1 = arith.constant 0 : i32
    return %arg0, %c0_i32, %c0_i32_0 : i32, i32, i32
  }
  func.func @transform_7(%arg0: i32) -> (i32, i32, i32) {
    %c0_i32 = arith.constant 0 : i32
    %c0_i32_0 = arith.constant 0 : i32
    %c0_i32_1 = arith.constant 0 : i32
    return %arg0, %c0_i32, %c0_i32_0 : i32, i32, i32
  }
  func.func @transform_8(%arg0: i32) -> (i32, i32, i32) {
    %c0_i32 = arith.constant 0 : i32
    %c0_i32_0 = arith.constant 0 : i32
    %c0_i32_1 = arith.constant 0 : i32
    return %arg0, %c0_i32, %c0_i32_0 : i32, i32, i32
  }
  func.func @transform_9(%arg0: i32) -> (i32, i32, i32) {
    %c0_i32 = arith.constant 0 : i32
    %c0_i32_0 = arith.constant 0 : i32
    %c0_i32_1 = arith.constant 0 : i32
    return %arg0, %c0_i32, %c0_i32_0 : i32, i32, i32
  }
  func.func @transform_10(%arg0: i32) -> (i32, i32, i32) {
    %c0_i32 = arith.constant 0 : i32
    %c0_i32_0 = arith.constant 0 : i32
    %c0_i32_1 = arith.constant 0 : i32
    return %arg0, %c0_i32, %c0_i32_0 : i32, i32, i32
  }
  func.func @transform_11(%arg0: i32) -> (i32, i32, i32) {
    %c0_i32 = arith.constant 0 : i32
    %c0_i32_0 = arith.constant 0 : i32
    %c0_i32_1 = arith.constant 0 : i32
    return %arg0, %c0_i32, %c0_i32_0 : i32, i32, i32
  }
  func.func @transform_12(%arg0: i32) -> (i32, i32, i32) {
    %c0_i32 = arith.constant 0 : i32
    %c0_i32_0 = arith.constant 0 : i32
    %c0_i32_1 = arith.constant 0 : i32
    return %arg0, %c0_i32, %c0_i32_0 : i32, i32, i32
  }
  func.func @transform_13(%arg0: i32) -> (i32, i32, i32) {
    %c0_i32 = arith.constant 0 : i32
    %c0_i32_0 = arith.constant 0 : i32
    %c0_i32_1 = arith.constant 0 : i32
    return %arg0, %c0_i32, %c0_i32_0 : i32, i32, i32
  }
  func.func @transform_14(%arg0: i32) -> (i32, i32, i32) {
    %c0_i32 = arith.constant 0 : i32
    %c0_i32_0 = arith.constant 0 : i32
    %c0_i32_1 = arith.constant 0 : i32
    return %arg0, %c0_i32, %c0_i32_0 : i32, i32, i32
  }
  func.func @transform_15(%arg0: i32) -> (i32, i32, i32) {
    %c0_i32 = arith.constant 0 : i32
    %c0_i32_0 = arith.constant 0 : i32
    %c0_i32_1 = arith.constant 0 : i32
    return %arg0, %c0_i32, %c0_i32_0 : i32, i32, i32
  }
  func.func @transform_16(%arg0: i32) -> (i32, i32, i32) {
    %c0_i32 = arith.constant 0 : i32
    %c0_i32_0 = arith.constant 0 : i32
    %c0_i32_1 = arith.constant 0 : i32
    return %arg0, %c0_i32, %c0_i32_0 : i32, i32, i32
  }
  func.func @transform_17(%arg0: i32) -> (i32, i32, i32) {
    %c0_i32 = arith.constant 0 : i32
    %c0_i32_0 = arith.constant 0 : i32
    %c0_i32_1 = arith.constant 0 : i32
    return %arg0, %c0_i32, %c0_i32_0 : i32, i32, i32
  }
  func.func @transform_18(%arg0: i32) -> (i32, i32, i32) {
    %c0_i32 = arith.constant 0 : i32
    %c0_i32_0 = arith.constant 0 : i32
    %c0_i32_1 = arith.constant 0 : i32
    return %arg0, %c0_i32, %c0_i32_0 : i32, i32, i32
  }
  func.func @transform_19(%arg0: i32) -> (i32, i32, i32) {
    %c0_i32 = arith.constant 0 : i32
    %c0_i32_0 = arith.constant 0 : i32
    %c0_i32_1 = arith.constant 0 : i32
    return %arg0, %c0_i32, %c0_i32_0 : i32, i32, i32
  }
  func.func @transform_20(%arg0: i32) -> (i32, i32, i32) {
    %c0_i32 = arith.constant 0 : i32
    %c0_i32_0 = arith.constant 0 : i32
    %c0_i32_1 = arith.constant 0 : i32
    return %arg0, %c0_i32, %c0_i32_0 : i32, i32, i32
  }
}

</mosaic_0001>

<llo_original>
// kernel: tpu_custom_call.1
$region0: #{tpu_custom_call.1}
  #allocation0 [shape = 'u32[]', space=smem, size = 0x4, offset = 0x4, fixed_abs, tag = 'smem constant byte address 0x4 - core index']
  #allocation1 [shape = 'u32[144,128]{1,0:T(1,128)}', space=vmem, size = 0x12000, scoped, tag = 'internal scratch']
  %s0 = inlined_call_operand.hbm [shape: f32[8,128], index: 0, kind: input, shape index: {}]
  %s1 = inlined_call_operand.hbm [shape: f32[8,128], index: 1, kind: input, shape index: {}]
  %s2 = inlined_call_operand.hbm [shape: bf16[2,128,128], index: 2, kind: input, shape index: {}]
  %s3 = inlined_call_operand.hbm [shape: bf16[2,128,128], index: 3, kind: input, shape index: {}]
  %s4 = inlined_call_operand.hbm [shape: bf16[2,128,128], index: 4, kind: input, shape index: {}]
  %s5 = inlined_call_operand.hbm [shape: bf16[2,128,128], index: 5, kind: input, shape index: {}]
  %s6 = inlined_call_operand.vmem [shape: f32[2,1,128], index: 6, kind: input, shape index: {}]
  %s7 = inlined_call_operand.vmem [shape: f32[2,1,128], index: 7, kind: input, shape index: {}]
  %s8 = inlined_call_operand.vmem [shape: f32[2,1,128], index: 8, kind: input, shape index: {}]
  %s9 = inlined_call_operand.vmem [shape: f32[2,1,128], index: 9, kind: input, shape index: {}]
  %s10 = inlined_call_operand.hbm [shape: bf16[2,128,128], index: 10, kind: input, shape index: {}]
  %s11 = inlined_call_operand.hbm [shape: bf16[2,128,128], index: 11, kind: input, shape index: {}]
  %s12 = inlined_call_operand.vmem [shape: f32[2,1,128], index: 12, kind: input, shape index: {}]
  %s13 = inlined_call_operand.vmem [shape: f32[2,1,128], index: 13, kind: input, shape index: {}]
  %s14 = inlined_call_operand.vmem [shape: f32[2,1,128], index: 14, kind: input, shape index: {}]
  %s15 = inlined_call_operand.hbm [shape: bf16[2,128,128], index: 15, kind: input, shape index: {}]
  %s16 = inlined_call_operand.hbm [shape: bf16[2,128,128], index: 16, kind: input, shape index: {}]
  %s17 = inlined_call_operand.vmem [shape: f32[2,1,128], index: 17, kind: input, shape index: {}]
  %s18 = inlined_call_operand.vmem [shape: f32[2,1,128], index: 18, kind: input, shape index: {}]
  %s19 = inlined_call_operand.vmem [shape: f32[2,1,128], index: 19, kind: input, shape index: {}]
  %s20 = inlined_call_operand.hbm [shape: f32[2,8,128], index: 20, kind: output, shape index: {}]
  %s21 = sld [smem:[#allocation0]]
  $region161: #{tpu_custom_call.1} parent=0
    _
  %s23 = ssub.s32 1, %s21
  %s24 = scalar_select 0, %s23, %s21
  $region1: #{tpu_custom_call.1} parent=0
    #allocation2 [shape = 'u8[4096]{0}', space=vmem, size = 0x1000, scoped, tag = 'input window, operand 0, single buffered']
    #allocation3 [shape = 's32[2]{0}', space=sflag, size = 0x8, scoped, tag = 'scoped memory for tpu_custom_call.1']
    #allocation4 [shape = 's32[2]{0}', space=sflag, size = 0x8, scoped, tag = 'scoped memory for tpu_custom_call.1']
    #allocation5 [shape = 'u8[4096]{0}', space=vmem, size = 0x1000, scoped, tag = 'input window, operand 1, single buffered']
    #allocation6 [shape = 's32[1]{0}', space=sflag, size = 0x4, scoped, tag = 'scoped memory for tpu_custom_call.1']
    #allocation7 [shape = 'u8[65536]{0}', space=vmem, size = 0x10000, scoped, tag = 'input window, operand 2']
    #allocation8 [shape = 'u8[65536]{0}', space=vmem, size = 0x10000, scoped, tag = 'input window, operand 3']
    #allocation9 [shape = 'u8[65536]{0}', space=vmem, size = 0x10000, scoped, tag = 'input window, operand 4']
    #allocation10 [shape = 'u8[65536]{0}', space=vmem, size = 0x10000, scoped, tag = 'input window, operand 5']
    #allocation11 [shape = 'u8[65536]{0}', space=vmem, size = 0x10000, scoped, tag = 'input window, operand 10']
    #allocation12 [shape = 'u8[65536]{0}', space=vmem, size = 0x10000, scoped, tag = 'input window, operand 11']
    #allocation13 [shape = 'u8[65536]{0}', space=vmem, size = 0x10000, scoped, tag = 'input window, operand 15']
    #allocation14 [shape = 'u8[65536]{0}', space=vmem, size = 0x10000, scoped, tag = 'input window, operand 16']
    #allocation15 [shape = 'u8[8192]{0}', space=vmem, size = 0x2000, scoped, tag = 'output window, operand 0']
    %25 = vsyncpa [#allocation3], 0
    %26 = vsyncpa [#allocation6], 0
    %27 = vsyncpa [#allocation4], 0
    %s28 = scalar_lea.sflag [#allocation4], 1
    %29 = vsyncpa %s28, 0
    loop: start=0, step=1, limit=4
    $region2: #{tpu_custom_call.1} parent=1 // loop_pre_header
      _
    $region3: #{tpu_custom_call.1} parent=1 // loop_header
      %s31 = sphi 0, %s35
      %p32 = scmp.ge.s32.totalorder %s31, 4
      %s39 = sphi 0, %s39
      %s41 = sphi 0, %s39
      %s42 = sphi 0, %s41
      %s56 = sphi 0, %s42
      %s60 = sphi 0, %s60
      %s62 = sphi 0, %s60
      %s63 = sphi 0, %s62
      %s77 = sphi 0, %s63
      %s83 = sphi 0, %s85
      %s86 = sphi 0, %s83
      %s87 = sphi 0, %s86
      %s103 = sphi 0, %s87
      %s109 = sphi 0, %s111
      %s112 = sphi 0, %s109
      %s113 = sphi 0, %s112
      %s129 = sphi 0, %s113
      %s135 = sphi 0, %s137
      %s138 = sphi 0, %s135
      %s139 = sphi 0, %s138
      %s155 = sphi 0, %s139
      %s161 = sphi 0, %s163
      %s164 = sphi 0, %s161
      %s165 = sphi 0, %s164
      %s181 = sphi 0, %s165
      %s187 = sphi 0, %s189
      %s190 = sphi 0, %s187
      %s191 = sphi 0, %s190
      %s207 = sphi 0, %s191
      %s213 = sphi 0, %s215
      %s216 = sphi 0, %s213
      %s217 = sphi 0, %s216
      %s233 = sphi 0, %s217
      %s239 = sphi 0, %s241
      %s242 = sphi 0, %s239
      %s243 = sphi 0, %s242
      %s259 = sphi 0, %s243
      %s265 = sphi 0, %s267
      %s268 = sphi 0, %s265
      %s269 = sphi 0, %s268
      %s285 = sphi 0, %s269
      %s291 = sphi 0, %s293
      %s294 = sphi 0, %s291
      %s295 = sphi 0, %s294
      %s311 = sphi 0, %s295
      %s317 = sphi 0, %s319
      %s320 = sphi 0, %s317
      %s321 = sphi 0, %s320
      %s337 = sphi 0, %s321
      %s343 = sphi 0, %s345
      %s346 = sphi 0, %s343
      %s347 = sphi 0, %s346
      %s363 = sphi 0, %s347
      %s369 = sphi 0, %s371
      %s372 = sphi 0, %s369
      %s373 = sphi 0, %s372
      %s389 = sphi 0, %s373
      %s395 = sphi 0, %s397
      %s398 = sphi 0, %s395
      %s399 = sphi 0, %s398
      %s415 = sphi 0, %s399
      %s421 = sphi 0, %s423
      %s424 = sphi 0, %s421
      %s425 = sphi 0, %s424
      %s441 = sphi 0, %s425
      %s447 = sphi 0, %s449
      %s450 = sphi 0, %s447
      %s451 = sphi 0, %s450
      %s467 = sphi 0, %s451
      %s473 = sphi 0, %s475
      %s476 = sphi 0, %s473
      %s477 = sphi 0, %s476
      %s493 = sphi 0, %s477
      %s499 = sphi 0, %s501
      %s502 = sphi 0, %s499
      %s503 = sphi 0, %s502
      %s519 = sphi 0, %s503
      %s525 = sphi 0, %s527
      %s528 = sphi 0, %s525
      %s529 = sphi 0, %s528
      %s545 = sphi 0, %s529
      %s551 = sphi 0, %s553
      %s554 = sphi 0, %s551
      %s555 = sphi 0, %s554
      %s571 = sphi 0, %s555
    $region4: #{tpu_custom_call.1} parent=1 // loop_header_branch
      %34 = sbr.rel (%p32) target = $region8
    $region5: #{tpu_custom_call.1} parent=1 // loop_body
      %s36 = ssub.s32 %s31, 1
      %s37 = ssub.s32 %s31, 2
      %s38 = sadd.s32 %s31, 1
      %s40 = sadd.s32 %s39, 1
      %p43 = scmp.eq.s32.totalorder %s31, 1
      %p44 = scmp.ne.s32.totalorder %s39, %s41
      %p45 = scmp.eq.s32.totalorder %s31, 0
      %p46 = por %p44, %p45
      %p47 = scmp.ne.s32.totalorder %s39, %s41
      %p48 = scmp.eq.s32.totalorder %s36, 1
      %p49 = por %p47, %p48
      %p50 = scmp.ne.s32.totalorder %s41, %s42
      %p51 = scmp.eq.s32.totalorder %s36, 0
      %p52 = por %p50, %p51
      %p53 = scmp.ne.s32.totalorder %s41, %s42
      %p54 = scmp.eq.s32.totalorder %s37, 1
      %p55 = por %p53, %p54
      %p57 = scmp.ne.s32.totalorder %s42, %s56
      %p58 = scmp.eq.s32.totalorder %s37, 0
      %p59 = por %p57, %p58
      %s61 = sadd.s32 %s60, 1
      %p64 = scmp.eq.s32.totalorder %s31, 1
      %p65 = scmp.ne.s32.totalorder %s60, %s62
      %p66 = scmp.eq.s32.totalorder %s31, 0
      %p67 = por %p65, %p66
      %p68 = scmp.ne.s32.totalorder %s60, %s62
      %p69 = scmp.eq.s32.totalorder %s36, 1
      %p70 = por %p68, %p69
      %p71 = scmp.ne.s32.totalorder %s62, %s63
      %p72 = scmp.eq.s32.totalorder %s36, 0
      %p73 = por %p71, %p72
      %p74 = scmp.ne.s32.totalorder %s62, %s63
      %p75 = scmp.eq.s32.totalorder %s37, 1
      %p76 = por %p74, %p75
      %p78 = scmp.ne.s32.totalorder %s63, %s77
      %p79 = scmp.eq.s32.totalorder %s37, 0
      %p80 = por %p78, %p79
      %s81 = ssub.s32 %s31, %s38
      %p82 = scmp.eq.s32.totalorder %s81, 0
      %s84 = sadd.s32 %s83, 1
      %s85 = scalar_select %p82, %s83, %s84
      %p88 = pneg %p82
      %p89 = scmp.eq.s32.totalorder %s31, 1
      %p90 = por %p88, %p89
      %p91 = scmp.ne.s32.totalorder %s83, %s86
      %p92 = scmp.eq.s32.totalorder %s31, 0
      %p93 = por %p91, %p92
      %p94 = scmp.ne.s32.totalorder %s83, %s86
      %p95 = scmp.eq.s32.totalorder %s36, 1
      %p96 = por %p94, %p95
      %p97 = scmp.ne.s32.totalorder %s86, %s87
      %p98 = scmp.eq.s32.totalorder %s36, 0
      %p99 = por %p97, %p98
      %p100 = scmp.ne.s32.totalorder %s86, %s87
      %p101 = scmp.eq.s32.totalorder %s37, 1
      %p102 = por %p100, %p101
      %p104 = scmp.ne.s32.totalorder %s87, %s103
      %p105 = scmp.eq.s32.totalorder %s37, 0
      %p106 = por %p104, %p105
      %s107 = ssub.s32 %s31, %s38
      %p108 = scmp.eq.s32.totalorder %s107, 0
      %s110 = sadd.s32 %s109, 1
      %s111 = scalar_select %p108, %s109, %s110
      %p114 = pneg %p108
      %p115 = scmp.eq.s32.totalorder %s31, 1
      %p116 = por %p114, %p115
      %p117 = scmp.ne.s32.totalorder %s109, %s112
      %p118 = scmp.eq.s32.totalorder %s31, 0
      %p119 = por %p117, %p118
      %p120 = scmp.ne.s32.totalorder %s109, %s112
      %p121 = scmp.eq.s32.totalorder %s36, 1
      %p122 = por %p120, %p121
      %p123 = scmp.ne.s32.totalorder %s112, %s113
      %p124 = scmp.eq.s32.totalorder %s36, 0
      %p125 = por %p123, %p124
      %p126 = scmp.ne.s32.totalorder %s112, %s113
      %p127 = scmp.eq.s32.totalorder %s37, 1
      %p128 = por %p126, %p127
      %p130 = scmp.ne.s32.totalorder %s113, %s129
      %p131 = scmp.eq.s32.totalorder %s37, 0
      %p132 = por %p130, %p131
      %s133 = ssub.s32 %s31, %s38
      %p134 = scmp.eq.s32.totalorder %s133, 0
      %s136 = sadd.s32 %s135, 1
      %s137 = scalar_select %p134, %s135, %s136
      %p140 = pneg %p134
      %p141 = scmp.eq.s32.totalorder %s31, 1
      %p142 = por %p140, %p141
      %p143 = scmp.ne.s32.totalorder %s135, %s138
      %p144 = scmp.eq.s32.totalorder %s31, 0
      %p145 = por %p143, %p144
      %p146 = scmp.ne.s32.totalorder %s135, %s138
      %p147 = scmp.eq.s32.totalorder %s36, 1
      %p148 = por %p146, %p147
      %p149 = scmp.ne.s32.totalorder %s138, %s139
      %p150 = scmp.eq.s32.totalorder %s36, 0
      %p151 = por %p149, %p150
      %p152 = scmp.ne.s32.totalorder %s138, %s139
      %p153 = scmp.eq.s32.totalorder %s37, 1
      %p154 = por %p152, %p153
      %p156 = scmp.ne.s32.totalorder %s139, %s155
      %p157 = scmp.eq.s32.totalorder %s37, 0
      %p158 = por %p156, %p157
      %s159 = ssub.s32 %s31, %s38
      %p160 = scmp.eq.s32.totalorder %s159, 0
      %s162 = sadd.s32 %s161, 1
      %s163 = scalar_select %p160, %s161, %s162
      %p166 = pneg %p160
      %p167 = scmp.eq.s32.totalorder %s31, 1
      %p168 = por %p166, %p167
      %p169 = scmp.ne.s32.totalorder %s161, %s164
      %p170 = scmp.eq.s32.totalorder %s31, 0
      %p171 = por %p169, %p170
      %p172 = scmp.ne.s32.totalorder %s161, %s164
      %p173 = scmp.eq.s32.totalorder %s36, 1
      %p174 = por %p172, %p173
      %p175 = scmp.ne.s32.totalorder %s164, %s165
      %p176 = scmp.eq.s32.totalorder %s36, 0
      %p177 = por %p175, %p176
      %p178 = scmp.ne.s32.totalorder %s164, %s165
      %p179 = scmp.eq.s32.totalorder %s37, 1
      %p180 = por %p178, %p179
      %p182 = scmp.ne.s32.totalorder %s165, %s181
      %p183 = scmp.eq.s32.totalorder %s37, 0
      %p184 = por %p182, %p183
      %s185 = ssub.s32 %s31, %s38
      %p186 = scmp.eq.s32.totalorder %s185, 0
      %s188 = sadd.s32 %s187, 1
      %s189 = scalar_select %p186, %s187, %s188
      %p192 = pneg %p186
      %p193 = scmp.eq.s32.totalorder %s31, 1
      %p194 = por %p192, %p193
      %p195 = scmp.ne.s32.totalorder %s187, %s190
      %p196 = scmp.eq.s32.totalorder %s31, 0
      %p197 = por %p195, %p196
      %p198 = scmp.ne.s32.totalorder %s187, %s190
      %p199 = scmp.eq.s32.totalorder %s36, 1
      %p200 = por %p198, %p199
      %p201 = scmp.ne.s32.totalorder %s190, %s191
      %p202 = scmp.eq.s32.totalorder %s36, 0
      %p203 = por %p201, %p202
      %p204 = scmp.ne.s32.totalorder %s190, %s191
      %p205 = scmp.eq.s32.totalorder %s37, 1
      %p206 = por %p204, %p205
      %p208 = scmp.ne.s32.totalorder %s191, %s207
      %p209 = scmp.eq.s32.totalorder %s37, 0
      %p210 = por %p208, %p209
      %s211 = ssub.s32 %s31, %s38
      %p212 = scmp.eq.s32.totalorder %s211, 0
      %s214 = sadd.s32 %s213, 1
      %s215 = scalar_select %p212, %s213, %s214
      %p218 = pneg %p212
      %p219 = scmp.eq.s32.totalorder %s31, 1
      %p220 = por %p218, %p219
      %p221 = scmp.ne.s32.totalorder %s213, %s216
      %p222 = scmp.eq.s32.totalorder %s31, 0
      %p223 = por %p221, %p222
      %p224 = scmp.ne.s32.totalorder %s213, %s216
      %p225 = scmp.eq.s32.totalorder %s36, 1
      %p226 = por %p224, %p225
      %p227 = scmp.ne.s32.totalorder %s216, %s217
      %p228 = scmp.eq.s32.totalorder %s36, 0
      %p229 = por %p227, %p228
      %p230 = scmp.ne.s32.totalorder %s216, %s217
      %p231 = scmp.eq.s32.totalorder %s37, 1
      %p232 = por %p230, %p231
      %p234 = scmp.ne.s32.totalorder %s217, %s233
      %p235 = scmp.eq.s32.totalorder %s37, 0
      %p236 = por %p234, %p235
      %s237 = ssub.s32 %s31, %s38
      %p238 = scmp.eq.s32.totalorder %s237, 0
      %s240 = sadd.s32 %s239, 1
      %s241 = scalar_select %p238, %s239, %s240
      %p244 = pneg %p238
      %p245 = scmp.eq.s32.totalorder %s31, 1
      %p246 = por %p244, %p245
      %p247 = scmp.ne.s32.totalorder %s239, %s242
      %p248 = scmp.eq.s32.totalorder %s31, 0
      %p249 = por %p247, %p248
      %p250 = scmp.ne.s32.totalorder %s239, %s242
      %p251 = scmp.eq.s32.totalorder %s36, 1
      %p252 = por %p250, %p251
      %p253 = scmp.ne.s32.totalorder %s242, %s243
      %p254 = scmp.eq.s32.totalorder %s36, 0
      %p255 = por %p253, %p254
      %p256 = scmp.ne.s32.totalorder %s242, %s243
      %p257 = scmp.eq.s32.totalorder %s37, 1
      %p258 = por %p256, %p257
      %p260 = scmp.ne.s32.totalorder %s243, %s259
      %p261 = scmp.eq.s32.totalorder %s37, 0
      %p262 = por %p260, %p261
      %s263 = ssub.s32 %s31, %s38
      %p264 = scmp.eq.s32.totalorder %s263, 0
      %s266 = sadd.s32 %s265, 1
      %s267 = scalar_select %p264, %s265, %s266
      %p270 = pneg %p264
      %p271 = scmp.eq.s32.totalorder %s31, 1
      %p272 = por %p270, %p271
      %p273 = scmp.ne.s32.totalorder %s265, %s268
      %p274 = scmp.eq.s32.totalorder %s31, 0
      %p275 = por %p273, %p274
      %p276 = scmp.ne.s32.totalorder %s265, %s268
      %p277 = scmp.eq.s32.totalorder %s36, 1
      %p278 = por %p276, %p277
      %p279 = scmp.ne.s32.totalorder %s268, %s269
      %p280 = scmp.eq.s32.totalorder %s36, 0
      %p281 = por %p279, %p280
      %p282 = scmp.ne.s32.totalorder %s268, %s269
      %p283 = scmp.eq.s32.totalorder %s37, 1
      %p284 = por %p282, %p283
      %p286 = scmp.ne.s32.totalorder %s269, %s285
      %p287 = scmp.eq.s32.totalorder %s37, 0
      %p288 = por %p286, %p287
      %s289 = ssub.s32 %s31, %s38
      %p290 = scmp.eq.s32.totalorder %s289, 0
      %s292 = sadd.s32 %s291, 1
      %s293 = scalar_select %p290, %s291, %s292
      %p296 = pneg %p290
      %p297 = scmp.eq.s32.totalorder %s31, 1
      %p298 = por %p296, %p297
      %p299 = scmp.ne.s32.totalorder %s291, %s294
      %p300 = scmp.eq.s32.totalorder %s31, 0
      %p301 = por %p299, %p300
      %p302 = scmp.ne.s32.totalorder %s291, %s294
      %p303 = scmp.eq.s32.totalorder %s36, 1
      %p304 = por %p302, %p303
      %p305 = scmp.ne.s32.totalorder %s294, %s295
      %p306 = scmp.eq.s32.totalorder %s36, 0
      %p307 = por %p305, %p306
      %p308 = scmp.ne.s32.totalorder %s294, %s295
      %p309 = scmp.eq.s32.totalorder %s37, 1
      %p310 = por %p308, %p309
      %p312 = scmp.ne.s32.totalorder %s295, %s311
      %p313 = scmp.eq.s32.totalorder %s37, 0
      %p314 = por %p312, %p313
      %s315 = ssub.s32 %s31, %s38
      %p316 = scmp.eq.s32.totalorder %s315, 0
      %s318 = sadd.s32 %s317, 1
      %s319 = scalar_select %p316, %s317, %s318
      %p322 = pneg %p316
      %p323 = scmp.eq.s32.totalorder %s31, 1
      %p324 = por %p322, %p323
      %p325 = scmp.ne.s32.totalorder %s317, %s320
      %p326 = scmp.eq.s32.totalorder %s31, 0
      %p327 = por %p325, %p326
      %p328 = scmp.ne.s32.totalorder %s317, %s320
      %p329 = scmp.eq.s32.totalorder %s36, 1
      %p330 = por %p328, %p329
      %p331 = scmp.ne.s32.totalorder %s320, %s321
      %p332 = scmp.eq.s32.totalorder %s36, 0
      %p333 = por %p331, %p332
      %p334 = scmp.ne.s32.totalorder %s320, %s321
      %p335 = scmp.eq.s32.totalorder %s37, 1
      %p336 = por %p334, %p335
      %p338 = scmp.ne.s32.totalorder %s321, %s337
      %p339 = scmp.eq.s32.totalorder %s37, 0
      %p340 = por %p338, %p339
      %s341 = ssub.s32 %s31, %s38
      %p342 = scmp.eq.s32.totalorder %s341, 0
      %s344 = sadd.s32 %s343, 1
      %s345 = scalar_select %p342, %s343, %s344
      %p348 = pneg %p342
      %p349 = scmp.eq.s32.totalorder %s31, 1
      %p350 = por %p348, %p349
      %p351 = scmp.ne.s32.totalorder %s343, %s346
      %p352 = scmp.eq.s32.totalorder %s31, 0
      %p353 = por %p351, %p352
      %p354 = scmp.ne.s32.totalorder %s343, %s346
      %p355 = scmp.eq.s32.totalorder %s36, 1
      %p356 = por %p354, %p355
      %p357 = scmp.ne.s32.totalorder %s346, %s347
      %p358 = scmp.eq.s32.totalorder %s36, 0
      %p359 = por %p357, %p358
      %p360 = scmp.ne.s32.totalorder %s346, %s347
      %p361 = scmp.eq.s32.totalorder %s37, 1
      %p362 = por %p360, %p361
      %p364 = scmp.ne.s32.totalorder %s347, %s363
      %p365 = scmp.eq.s32.totalorder %s37, 0
      %p366 = por %p364, %p365
      %s367 = ssub.s32 %s31, %s38
      %p368 = scmp.eq.s32.totalorder %s367, 0
      %s370 = sadd.s32 %s369, 1
      %s371 = scalar_select %p368, %s369, %s370
      %p374 = pneg %p368
      %p375 = scmp.eq.s32.totalorder %s31, 1
      %p376 = por %p374, %p375
      %p377 = scmp.ne.s32.totalorder %s369, %s372
      %p378 = scmp.eq.s32.totalorder %s31, 0
      %p379 = por %p377, %p378
      %p380 = scmp.ne.s32.totalorder %s369, %s372
      %p381 = scmp.eq.s32.totalorder %s36, 1
      %p382 = por %p380, %p381
      %p383 = scmp.ne.s32.totalorder %s372, %s373
      %p384 = scmp.eq.s32.totalorder %s36, 0
      %p385 = por %p383, %p384
      %p386 = scmp.ne.s32.totalorder %s372, %s373
      %p387 = scmp.eq.s32.totalorder %s37, 1
      %p388 = por %p386, %p387
      %p390 = scmp.ne.s32.totalorder %s373, %s389
      %p391 = scmp.eq.s32.totalorder %s37, 0
      %p392 = por %p390, %p391
      %s393 = ssub.s32 %s31, %s38
      %p394 = scmp.eq.s32.totalorder %s393, 0
      %s396 = sadd.s32 %s395, 1
      %s397 = scalar_select %p394, %s395, %s396
      %p400 = pneg %p394
      %p401 = scmp.eq.s32.totalorder %s31, 1
      %p402 = por %p400, %p401
      %p403 = scmp.ne.s32.totalorder %s395, %s398
      %p404 = scmp.eq.s32.totalorder %s31, 0
      %p405 = por %p403, %p404
      %p406 = scmp.ne.s32.totalorder %s395, %s398
      %p407 = scmp.eq.s32.totalorder %s36, 1
      %p408 = por %p406, %p407
      %p409 = scmp.ne.s32.totalorder %s398, %s399
      %p410 = scmp.eq.s32.totalorder %s36, 0
      %p411 = por %p409, %p410
      %p412 = scmp.ne.s32.totalorder %s398, %s399
      %p413 = scmp.eq.s32.totalorder %s37, 1
      %p414 = por %p412, %p413
      %p416 = scmp.ne.s32.totalorder %s399, %s415
      %p417 = scmp.eq.s32.totalorder %s37, 0
      %p418 = por %p416, %p417
      %s419 = ssub.s32 %s31, %s38
      %p420 = scmp.eq.s32.totalorder %s419, 0
      %s422 = sadd.s32 %s421, 1
      %s423 = scalar_select %p420, %s421, %s422
      %p426 = pneg %p420
      %p427 = scmp.eq.s32.totalorder %s31, 1
      %p428 = por %p426, %p427
      %p429 = scmp.ne.s32.totalorder %s421, %s424
      %p430 = scmp.eq.s32.totalorder %s31, 0
      %p431 = por %p429, %p430
      %p432 = scmp.ne.s32.totalorder %s421, %s424
      %p433 = scmp.eq.s32.totalorder %s36, 1
      %p434 = por %p432, %p433
      %p435 = scmp.ne.s32.totalorder %s424, %s425
      %p436 = scmp.eq.s32.totalorder %s36, 0
      %p437 = por %p435, %p436
      %p438 = scmp.ne.s32.totalorder %s424, %s425
      %p439 = scmp.eq.s32.totalorder %s37, 1
      %p440 = por %p438, %p439
      %p442 = scmp.ne.s32.totalorder %s425, %s441
      %p443 = scmp.eq.s32.totalorder %s37, 0
      %p444 = por %p442, %p443
      %s445 = ssub.s32 %s31, %s38
      %p446 = scmp.eq.s32.totalorder %s445, 0
      %s448 = sadd.s32 %s447, 1
      %s449 = scalar_select %p446, %s447, %s448
      %p452 = pneg %p446
      %p453 = scmp.eq.s32.totalorder %s31, 1
      %p454 = por %p452, %p453
      %p455 = scmp.ne.s32.totalorder %s447, %s450
      %p456 = scmp.eq.s32.totalorder %s31, 0
      %p457 = por %p455, %p456
      %p458 = scmp.ne.s32.totalorder %s447, %s450
      %p459 = scmp.eq.s32.totalorder %s36, 1
      %p460 = por %p458, %p459
      %p461 = scmp.ne.s32.totalorder %s450, %s451
      %p462 = scmp.eq.s32.totalorder %s36, 0
      %p463 = por %p461, %p462
      %p464 = scmp.ne.s32.totalorder %s450, %s451
      %p465 = scmp.eq.s32.totalorder %s37, 1
      %p466 = por %p464, %p465
      %p468 = scmp.ne.s32.totalorder %s451, %s467
      %p469 = scmp.eq.s32.totalorder %s37, 0
      %p470 = por %p468, %p469
      %s471 = ssub.s32 %s31, %s38
      %p472 = scmp.eq.s32.totalorder %s471, 0
      %s474 = sadd.s32 %s473, 1
      %s475 = scalar_select %p472, %s473, %s474
      %p478 = pneg %p472
      %p479 = scmp.eq.s32.totalorder %s31, 1
      %p480 = por %p478, %p479
      %p481 = scmp.ne.s32.totalorder %s473, %s476
      %p482 = scmp.eq.s32.totalorder %s31, 0
      %p483 = por %p481, %p482
      %p484 = scmp.ne.s32.totalorder %s473, %s476
      %p485 = scmp.eq.s32.totalorder %s36, 1
      %p486 = por %p484, %p485
      %p487 = scmp.ne.s32.totalorder %s476, %s477
      %p488 = scmp.eq.s32.totalorder %s36, 0
      %p489 = por %p487, %p488
      %p490 = scmp.ne.s32.totalorder %s476, %s477
      %p491 = scmp.eq.s32.totalorder %s37, 1
      %p492 = por %p490, %p491
      %p494 = scmp.ne.s32.totalorder %s477, %s493
      %p495 = scmp.eq.s32.totalorder %s37, 0
      %p496 = por %p494, %p495
      %s497 = ssub.s32 %s31, %s38
      %p498 = scmp.eq.s32.totalorder %s497, 0
      %s500 = sadd.s32 %s499, 1
      %s501 = scalar_select %p498, %s499, %s500
      %p504 = pneg %p498
      %p505 = scmp.eq.s32.totalorder %s31, 1
      %p506 = por %p504, %p505
      %p507 = scmp.ne.s32.totalorder %s499, %s502
      %p508 = scmp.eq.s32.totalorder %s31, 0
      %p509 = por %p507, %p508
      %p510 = scmp.ne.s32.totalorder %s499, %s502
      %p511 = scmp.eq.s32.totalorder %s36, 1
      %p512 = por %p510, %p511
      %p513 = scmp.ne.s32.totalorder %s502, %s503
      %p514 = scmp.eq.s32.totalorder %s36, 0
      %p515 = por %p513, %p514
      %p516 = scmp.ne.s32.totalorder %s502, %s503
      %p517 = scmp.eq.s32.totalorder %s37, 1
      %p518 = por %p516, %p517
      %p520 = scmp.ne.s32.totalorder %s503, %s519
      %p521 = scmp.eq.s32.totalorder %s37, 0
      %p522 = por %p520, %p521
      %s523 = ssub.s32 %s31, %s38
      %p524 = scmp.eq.s32.totalorder %s523, 0
      %s526 = sadd.s32 %s525, 1
      %s527 = scalar_select %p524, %s525, %s526
      %p530 = pneg %p524
      %p531 = scmp.eq.s32.totalorder %s31, 1
      %p532 = por %p530, %p531
      %p533 = scmp.ne.s32.totalorder %s525, %s528
      %p534 = scmp.eq.s32.totalorder %s31, 0
      %p535 = por %p533, %p534
      %p536 = scmp.ne.s32.totalorder %s525, %s528
      %p537 = scmp.eq.s32.totalorder %s36, 1
      %p538 = por %p536, %p537
      %p539 = scmp.ne.s32.totalorder %s528, %s529
      %p540 = scmp.eq.s32.totalorder %s36, 0
      %p541 = por %p539, %p540
      %p542 = scmp.ne.s32.totalorder %s528, %s529
      %p543 = scmp.eq.s32.totalorder %s37, 1
      %p544 = por %p542, %p543
      %p546 = scmp.ne.s32.totalorder %s529, %s545
      %p547 = scmp.eq.s32.totalorder %s37, 0
      %p548 = por %p546, %p547
      %s549 = ssub.s32 %s31, %s38
      %p550 = scmp.eq.s32.totalorder %s549, 0
      %s552 = sadd.s32 %s551, 1
      %s553 = scalar_select %p550, %s551, %s552
      %p556 = pneg %p550
      %p557 = scmp.eq.s32.totalorder %s31, 1
      %p558 = por %p556, %p557
      %p559 = scmp.ne.s32.totalorder %s551, %s554
      %p560 = scmp.eq.s32.totalorder %s31, 0
      %p561 = por %p559, %p560
      %p562 = scmp.ne.s32.totalorder %s551, %s554
      %p563 = scmp.eq.s32.totalorder %s36, 1
      %p564 = por %p562, %p563
      %p565 = scmp.ne.s32.totalorder %s554, %s555
      %p566 = scmp.eq.s32.totalorder %s36, 0
      %p567 = por %p565, %p566
      %p568 = scmp.ne.s32.totalorder %s554, %s555
      %p569 = scmp.eq.s32.totalorder %s37, 1
      %p570 = por %p568, %p569
      %p572 = scmp.ne.s32.totalorder %s555, %s571
      %p573 = scmp.eq.s32.totalorder %s37, 0
      %p574 = por %p572, %p573
      %p575 = scmp.le.s32.totalorder 1, %s31
      %p576 = scmp.lt.s32.totalorder %s31, 3
      %p577 = pnand %p575, %p576
      %p578 = pneg %p577
      // Predicated region
      $region9: #{tpu_custom_call.1} parent=5 // pred_check
        _
      $region10: #{tpu_custom_call.1} parent=5 // pred_check_branch
        %580 = sbr.rel (%p577) target = $region12
      $region11: #{tpu_custom_call.1} parent=5 // pred_region
        %s581 = ssub.s32 %s31, 1
        // Predicated region
        $region13: #{tpu_custom_call.1} parent=11 // pred_check
          %p582 = pneg %p52
        $region14: #{tpu_custom_call.1} parent=11 // pred_check_branch
          %584 = sbr.rel (%p582) target = $region16
        $region15: #{tpu_custom_call.1} parent=11 // pred_region
          %s586 = ssub.s32 128, 128
          %587 = vsyncadd [#allocation3], %s586
          %s589 = sshll.u32 [#allocation2], 4
          %s590 = int_to_ptr.vmem [resolvable:$true] %s589
          %592 = dma.hbm_to_vmem [thread:$0]  %s0, 128, %s590, [#allocation3]
        $region16: #{tpu_custom_call.1} parent=11 // pred_fallthru
          _
        // Predicated region
        $region17: #{tpu_custom_call.1} parent=11 // pred_check
          %p593 = pneg %p73
        $region18: #{tpu_custom_call.1} parent=11 // pred_check_branch
          %595 = sbr.rel (%p593) target = $region20
        $region19: #{tpu_custom_call.1} parent=11 // pred_region
          %s597 = ssub.s32 128, 128
          %598 = vsyncadd [#allocation6], %s597
          %s600 = sshll.u32 [#allocation5], 4
          %s601 = int_to_ptr.vmem [resolvable:$true] %s600
          %603 = dma.hbm_to_vmem [thread:$0]  %s1, 128, %s601, [#allocation6]
        $region20: #{tpu_custom_call.1} parent=11 // pred_fallthru
          _
      $region12: #{tpu_custom_call.1} parent=5 // pred_fallthru
        _
      %p604 = scmp.lt.s32.totalorder %s31, 2
      // Predicated region
      $region21: #{tpu_custom_call.1} parent=5 // pred_check
        %p605 = pneg %p604
      $region22: #{tpu_custom_call.1} parent=5 // pred_check_branch
        %607 = sbr.rel (%p605) target = $region24
      $region23: #{tpu_custom_call.1} parent=5 // pred_region
        // Predicated region
        $region25: #{tpu_custom_call.1} parent=23 // pred_check
          %p608 = pneg %p93
        $region26: #{tpu_custom_call.1} parent=23 // pred_check_branch
          %610 = sbr.rel (%p608) target = $region28
        $region27: #{tpu_custom_call.1} parent=23 // pred_region
          %s611 = sand.u32 %s31, 1
          %s612 = scalar_lea.sflag [#allocation3], %s611
          %s613 = sand.u32 %s83, 1
          %s614 = smul.addr %s613, 64
          %s615 = scalar_lea.vmem [#allocation7], %s614
          %s617 = ssub.s32 1024, 1024
          %618 = vsyncadd %s612, %s617
          %s619 = smul.addr %s31, 16
          %s620 = smul.addr %s619, 64
          %s621 = scalar_lea.hbm %s2, %s620
          %s622 = sshll.u32 %s615, 4
          %s623 = int_to_ptr.vmem [resolvable:$true] %s622
          %628 = dma.hbm_to_vmem [thread:$0]  %s621, 1024, %s623, %s612, 64, 64, 4
        $region28: #{tpu_custom_call.1} parent=23 // pred_fallthru
          _
        // Predicated region
        $region29: #{tpu_custom_call.1} parent=23 // pred_check
          %p629 = pneg %p119
        $region30: #{tpu_custom_call.1} parent=23 // pred_check_branch
          %631 = sbr.rel (%p629) target = $region32
        $region31: #{tpu_custom_call.1} parent=23 // pred_region
          %s632 = sand.u32 %s31, 1
          %s633 = scalar_lea.sflag [#allocation3], %s632
          %s634 = sand.u32 %s109, 1
          %s635 = smul.addr %s634, 64
          %s636 = scalar_lea.vmem [#allocation8], %s635
          %s638 = ssub.s32 1024, 1024
          %639 = vsyncadd %s633, %s638
          %s640 = smul.addr %s31, 16
          %s641 = smul.addr %s640, 64
          %s642 = scalar_lea.hbm %s3, %s641
          %s643 = sshll.u32 %s636, 4
          %s644 = int_to_ptr.vmem [resolvable:$true] %s643
          %649 = dma.hbm_to_vmem [thread:$0]  %s642, 1024, %s644, %s633, 64, 64, 4
        $region32: #{tpu_custom_call.1} parent=23 // pred_fallthru
          _
        // Predicated region
        $region33: #{tpu_custom_call.1} parent=23 // pred_check
          %p650 = pneg %p145
        $region34: #{tpu_custom_call.1} parent=23 // pred_check_branch
          %652 = sbr.rel (%p650) target = $region36
        $region35: #{tpu_custom_call.1} parent=23 // pred_region
          %s653 = sand.u32 %s31, 1
          %s654 = scalar_lea.sflag [#allocation3], %s653
          %s655 = sand.u32 %s135, 1
          %s656 = smul.addr %s655, 64
          %s657 = scalar_lea.vmem [#allocation9], %s656
          %s659 = ssub.s32 1024, 1024
          %660 = vsyncadd %s654, %s659
          %s661 = smul.addr %s31, 16
          %s662 = smul.addr %s661, 64
          %s663 = scalar_lea.hbm %s4, %s662
          %s664 = sshll.u32 %s657, 4
          %s665 = int_to_ptr.vmem [resolvable:$true] %s664
          %670 = dma.hbm_to_vmem [thread:$0]  %s663, 1024, %s665, %s654, 64, 64, 4
        $region36: #{tpu_custom_call.1} parent=23 // pred_fallthru
          _
        // Predicated region
        $region37: #{tpu_custom_call.1} parent=23 // pred_check
          %p671 = pneg %p171
        $region38: #{tpu_custom_call.1} parent=23 // pred_check_branch
          %673 = sbr.rel (%p671) target = $region40
        $region39: #{tpu_custom_call.1} parent=23 // pred_region
          %s674 = sand.u32 %s31, 1
          %s675 = scalar_lea.sflag [#allocation3], %s674
          %s676 = sand.u32 %s161, 1
          %s677 = smul.addr %s676, 64
          %s678 = scalar_lea.vmem [#allocation10], %s677
          %s680 = ssub.s32 1024, 1024
          %681 = vsyncadd %s675, %s680
          %s682 = smul.addr %s31, 16
          %s683 = smul.addr %s682, 64
          %s684 = scalar_lea.hbm %s5, %s683
          %s685 = sshll.u32 %s678, 4
          %s686 = int_to_ptr.vmem [resolvable:$true] %s685
          %691 = dma.hbm_to_vmem [thread:$0]  %s684, 1024, %s686, %s675, 64, 64, 4
        $region40: #{tpu_custom_call.1} parent=23 // pred_fallthru
          _
        // Predicated region
        $region41: #{tpu_custom_call.1} parent=23 // pred_check
          %p692 = pneg %p197
        $region42: #{tpu_custom_call.1} parent=23 // pred_check_branch
          %694 = sbr.rel (%p692) target = $region44
        $region43: #{tpu_custom_call.1} parent=23 // pred_region
          %p695 = scmp.lt.s32.totalorder %s31, 1
          %s696 = scalar_select %p695, %s31, 1
          %s697 = scalar_lea.vmem %s6, %s696
        $region44: #{tpu_custom_call.1} parent=23 // pred_fallthru
          _
        // Predicated region
        $region45: #{tpu_custom_call.1} parent=23 // pred_check
          %p698 = pneg %p223
        $region46: #{tpu_custom_call.1} parent=23 // pred_check_branch
          %700 = sbr.rel (%p698) target = $region48
        $region47: #{tpu_custom_call.1} parent=23 // pred_region
          %p701 = scmp.lt.s32.totalorder %s31, 1
          %s702 = scalar_select %p701, %s31, 1
          %s703 = scalar_lea.vmem %s7, %s702
        $region48: #{tpu_custom_call.1} parent=23 // pred_fallthru
          _
        // Predicated region
        $region49: #{tpu_custom_call.1} parent=23 // pred_check
          %p704 = pneg %p249
        $region50: #{tpu_custom_call.1} parent=23 // pred_check_branch
          %706 = sbr.rel (%p704) target = $region52
        $region51: #{tpu_custom_call.1} parent=23 // pred_region
          %p707 = scmp.lt.s32.totalorder %s31, 1
          %s708 = scalar_select %p707, %s31, 1
          %s709 = scalar_lea.vmem %s8, %s708
        $region52: #{tpu_custom_call.1} parent=23 // pred_fallthru
          _
        // Predicated region
        $region53: #{tpu_custom_call.1} parent=23 // pred_check
          %p710 = pneg %p275
        $region54: #{tpu_custom_call.1} parent=23 // pred_check_branch
          %712 = sbr.rel (%p710) target = $region56
        $region55: #{tpu_custom_call.1} parent=23 // pred_region
          %p713 = scmp.lt.s32.totalorder %s31, 1
          %s714 = scalar_select %p713, %s31, 1
          %s715 = scalar_lea.vmem %s9, %s714
        $region56: #{tpu_custom_call.1} parent=23 // pred_fallthru
          _
        // Predicated region
        $region57: #{tpu_custom_call.1} parent=23 // pred_check
          %p716 = pneg %p301
        $region58: #{tpu_custom_call.1} parent=23 // pred_check_branch
          %718 = sbr.rel (%p716) target = $region60
        $region59: #{tpu_custom_call.1} parent=23 // pred_region
          %s719 = sand.u32 %s31, 1
          %s720 = scalar_lea.sflag [#allocation3], %s719
          %s721 = sand.u32 %s291, 1
          %s722 = smul.addr %s721, 64
          %s723 = scalar_lea.vmem [#allocation11], %s722
          %s725 = ssub.s32 1024, 1024
          %726 = vsyncadd %s720, %s725
          %s727 = smul.addr %s31, 16
          %s728 = smul.addr %s727, 64
          %s729 = scalar_lea.hbm %s10, %s728
          %s730 = sshll.u32 %s723, 4
          %s731 = int_to_ptr.vmem [resolvable:$true] %s730
          %736 = dma.hbm_to_vmem [thread:$0]  %s729, 1024, %s731, %s720, 64, 64, 4
        $region60: #{tpu_custom_call.1} parent=23 // pred_fallthru
          _
        // Predicated region
        $region61: #{tpu_custom_call.1} parent=23 // pred_check
          %p737 = pneg %p327
        $region62: #{tpu_custom_call.1} parent=23 // pred_check_branch
          %739 = sbr.rel (%p737) target = $region64
        $region63: #{tpu_custom_call.1} parent=23 // pred_region
          %s740 = sand.u32 %s31, 1
          %s741 = scalar_lea.sflag [#allocation3], %s740
          %s742 = sand.u32 %s317, 1
          %s743 = smul.addr %s742, 64
          %s744 = scalar_lea.vmem [#allocation12], %s743
          %s746 = ssub.s32 1024, 1024
          %747 = vsyncadd %s741, %s746
          %s748 = smul.addr %s31, 16
          %s749 = smul.addr %s748, 64
          %s750 = scalar_lea.hbm %s11, %s749
          %s751 = sshll.u32 %s744, 4
          %s752 = int_to_ptr.vmem [resolvable:$true] %s751
          %757 = dma.hbm_to_vmem [thread:$0]  %s750, 1024, %s752, %s741, 64, 64, 4
        $region64: #{tpu_custom_call.1} parent=23 // pred_fallthru
          _
        // Predicated region
        $region65: #{tpu_custom_call.1} parent=23 // pred_check
          %p758 = pneg %p353
        $region66: #{tpu_custom_call.1} parent=23 // pred_check_branch
          %760 = sbr.rel (%p758) target = $region68
        $region67: #{tpu_custom_call.1} parent=23 // pred_region
          %p761 = scmp.lt.s32.totalorder %s31, 1
          %s762 = scalar_select %p761, %s31, 1
          %s763 = scalar_lea.vmem %s12, %s762
        $region68: #{tpu_custom_call.1} parent=23 // pred_fallthru
          _
        // Predicated region
        $region69: #{tpu_custom_call.1} parent=23 // pred_check
          %p764 = pneg %p379
        $region70: #{tpu_custom_call.1} parent=23 // pred_check_branch
          %766 = sbr.rel (%p764) target = $region72
        $region71: #{tpu_custom_call.1} parent=23 // pred_region
          %p767 = scmp.lt.s32.totalorder %s31, 1
          %s768 = scalar_select %p767, %s31, 1
          %s769 = scalar_lea.vmem %s13, %s768
        $region72: #{tpu_custom_call.1} parent=23 // pred_fallthru
          _
        // Predicated region
        $region73: #{tpu_custom_call.1} parent=23 // pred_check
          %p770 = pneg %p405
        $region74: #{tpu_custom_call.1} parent=23 // pred_check_branch
          %772 = sbr.rel (%p770) target = $region76
        $region75: #{tpu_custom_call.1} parent=23 // pred_region
          %p773 = scmp.lt.s32.totalorder %s31, 1
          %s774 = scalar_select %p773, %s31, 1
          %s775 = scalar_lea.vmem %s14, %s774
        $region76: #{tpu_custom_call.1} parent=23 // pred_fallthru
          _
        // Predicated region
        $region77: #{tpu_custom_call.1} parent=23 // pred_check
          %p776 = pneg %p431
        $region78: #{tpu_custom_call.1} parent=23 // pred_check_branch
          %778 = sbr.rel (%p776) target = $region80
        $region79: #{tpu_custom_call.1} parent=23 // pred_region
          %s779 = sand.u32 %s31, 1
          %s780 = scalar_lea.sflag [#allocation3], %s779
          %s781 = sand.u32 %s421, 1
          %s782 = smul.addr %s781, 64
          %s783 = scalar_lea.vmem [#allocation13], %s782
          %s785 = ssub.s32 1024, 1024
          %786 = vsyncadd %s780, %s785
          %s787 = smul.addr %s31, 16
          %s788 = smul.addr %s787, 64
          %s789 = scalar_lea.hbm %s15, %s788
          %s790 = sshll.u32 %s783, 4
          %s791 = int_to_ptr.vmem [resolvable:$true] %s790
          %796 = dma.hbm_to_vmem [thread:$0]  %s789, 1024, %s791, %s780, 64, 64, 4
        $region80: #{tpu_custom_call.1} parent=23 // pred_fallthru
          _
        // Predicated region
        $region81: #{tpu_custom_call.1} parent=23 // pred_check
          %p797 = pneg %p457
        $region82: #{tpu_custom_call.1} parent=23 // pred_check_branch
          %799 = sbr.rel (%p797) target = $region84
        $region83: #{tpu_custom_call.1} parent=23 // pred_region
          %s800 = sand.u32 %s31, 1
          %s801 = scalar_lea.sflag [#allocation3], %s800
          %s802 = sand.u32 %s447, 1
          %s803 = smul.addr %s802, 64
          %s804 = scalar_lea.vmem [#allocation14], %s803
          %s806 = ssub.s32 1024, 1024
          %807 = vsyncadd %s801, %s806
          %s808 = smul.addr %s31, 16
          %s809 = smul.addr %s808, 64
          %s810 = scalar_lea.hbm %s16, %s809
          %s811 = sshll.u32 %s804, 4
          %s812 = int_to_ptr.vmem [resolvable:$true] %s811
          %817 = dma.hbm_to_vmem [thread:$0]  %s810, 1024, %s812, %s801, 64, 64, 4
        $region84: #{tpu_custom_call.1} parent=23 // pred_fallthru
          _
        // Predicated region
        $region85: #{tpu_custom_call.1} parent=23 // pred_check
          %p818 = pneg %p483
        $region86: #{tpu_custom_call.1} parent=23 // pred_check_branch
          %820 = sbr.rel (%p818) target = $region88
        $region87: #{tpu_custom_call.1} parent=23 // pred_region
          %p821 = scmp.lt.s32.totalorder %s31, 1
          %s822 = scalar_select %p821, %s31, 1
          %s823 = scalar_lea.vmem %s17, %s822
        $region88: #{tpu_custom_call.1} parent=23 // pred_fallthru
          _
        // Predicated region
        $region89: #{tpu_custom_call.1} parent=23 // pred_check
          %p824 = pneg %p509
        $region90: #{tpu_custom_call.1} parent=23 // pred_check_branch
          %826 = sbr.rel (%p824) target = $region92
        $region91: #{tpu_custom_call.1} parent=23 // pred_region
          %p827 = scmp.lt.s32.totalorder %s31, 1
          %s828 = scalar_select %p827, %s31, 1
          %s829 = scalar_lea.vmem %s18, %s828
        $region92: #{tpu_custom_call.1} parent=23 // pred_fallthru
          _
        // Predicated region
        $region93: #{tpu_custom_call.1} parent=23 // pred_check
          %p830 = pneg %p535
        $region94: #{tpu_custom_call.1} parent=23 // pred_check_branch
          %832 = sbr.rel (%p830) target = $region96
        $region95: #{tpu_custom_call.1} parent=23 // pred_region
          %p833 = scmp.lt.s32.totalorder %s31, 1
          %s834 = scalar_select %p833, %s31, 1
          %s835 = scalar_lea.vmem %s19, %s834
        $region96: #{tpu_custom_call.1} parent=23 // pred_fallthru
          _
      $region24: #{tpu_custom_call.1} parent=5 // pred_fallthru
        _
      %p836 = scmp.le.s32.totalorder 1, %s31
      %p837 = scmp.lt.s32.totalorder %s31, 3
      %p838 = pnand %p836, %p837
      %p839 = pneg %p838
      // Predicated region
      $region97: #{tpu_custom_call.1} parent=5 // pred_check
        _
      $region98: #{tpu_custom_call.1} parent=5 // pred_check_branch
        %841 = sbr.rel (%p838) target = $region100
      $region99: #{tpu_custom_call.1} parent=5 // pred_region
        %s842 = ssub.s32 %s31, 1
        // Predicated region
        $region101: #{tpu_custom_call.1} parent=99 // pred_check
          %p843 = pneg %p52
        $region102: #{tpu_custom_call.1} parent=99 // pred_check_branch
          %845 = sbr.rel (%p843) target = $region104
        $region103: #{tpu_custom_call.1} parent=99 // pred_region
          %846 = dma.done [#allocation3], 128
        $region104: #{tpu_custom_call.1} parent=99 // pred_fallthru
          _
        // Predicated region
        $region105: #{tpu_custom_call.1} parent=99 // pred_check
          %p847 = pneg %p73
        $region106: #{tpu_custom_call.1} parent=99 // pred_check_branch
          %849 = sbr.rel (%p847) target = $region108
        $region107: #{tpu_custom_call.1} parent=99 // pred_region
          %850 = dma.done [#allocation6], 128
        $region108: #{tpu_custom_call.1} parent=99 // pred_fallthru
          _
        %s851 = sand.u32 %s36, 1
        %s852 = scalar_lea.sflag [#allocation3], %s851
        %s853 = sand.u32 %s86, 1
        %s854 = smul.addr %s853, 64
        %s855 = scalar_lea.vmem [#allocation7], %s854
        // Predicated region
        $region109: #{tpu_custom_call.1} parent=99 // pred_check
          %p856 = pneg %p99
        $region110: #{tpu_custom_call.1} parent=99 // pred_check_branch
          %858 = sbr.rel (%p856) target = $region112
        $region111: #{tpu_custom_call.1} parent=99 // pred_region
          %859 = dma.done %s852, 1024
        $region112: #{tpu_custom_call.1} parent=99 // pred_fallthru
          _
        %s860 = sand.u32 %s36, 1
        %s861 = scalar_lea.sflag [#allocation3], %s860
        %s862 = sand.u32 %s112, 1
        %s863 = smul.addr %s862, 64
        %s864 = scalar_lea.vmem [#allocation8], %s863
        // Predicated region
        $region113: #{tpu_custom_call.1} parent=99 // pred_check
          %p865 = pneg %p125
        $region114: #{tpu_custom_call.1} parent=99 // pred_check_branch
          %867 = sbr.rel (%p865) target = $region116
        $region115: #{tpu_custom_call.1} parent=99 // pred_region
          %868 = dma.done %s861, 1024
        $region116: #{tpu_custom_call.1} parent=99 // pred_fallthru
          _
        %s869 = sand.u32 %s36, 1
        %s870 = scalar_lea.sflag [#allocation3], %s869
        %s871 = sand.u32 %s138, 1
        %s872 = smul.addr %s871, 64
        %s873 = scalar_lea.vmem [#allocation9], %s872
        // Predicated region
        $region117: #{tpu_custom_call.1} parent=99 // pred_check
          %p874 = pneg %p151
        $region118: #{tpu_custom_call.1} parent=99 // pred_check_branch
          %876 = sbr.rel (%p874) target = $region120
        $region119: #{tpu_custom_call.1} parent=99 // pred_region
          %877 = dma.done %s870, 1024
        $region120: #{tpu_custom_call.1} parent=99 // pred_fallthru
          _
        %s878 = sand.u32 %s36, 1
        %s879 = scalar_lea.sflag [#allocation3], %s878
        %s880 = sand.u32 %s164, 1
        %s881 = smul.addr %s880, 64
        %s882 = scalar_lea.vmem [#allocation10], %s881
        // Predicated region
        $region121: #{tpu_custom_call.1} parent=99 // pred_check
          %p883 = pneg %p177
        $region122: #{tpu_custom_call.1} parent=99 // pred_check_branch
          %885 = sbr.rel (%p883) target = $region124
        $region123: #{tpu_custom_call.1} parent=99 // pred_region
          %886 = dma.done %s879, 1024
        $region124: #{tpu_custom_call.1} parent=99 // pred_fallthru
          _
        %s887 = sand.u32 %s36, 1
        %s888 = scalar_lea.sflag [#allocation3], %s887
        %s889 = sand.u32 %s294, 1
        %s890 = smul.addr %s889, 64
        %s891 = scalar_lea.vmem [#allocation11], %s890
        // Predicated region
        $region125: #{tpu_custom_call.1} parent=99 // pred_check
          %p892 = pneg %p307
        $region126: #{tpu_custom_call.1} parent=99 // pred_check_branch
          %894 = sbr.rel (%p892) target = $region128
        $region127: #{tpu_custom_call.1} parent=99 // pred_region
          %895 = dma.done %s888, 1024
        $region128: #{tpu_custom_call.1} parent=99 // pred_fallthru
          _
        %s896 = sand.u32 %s36, 1
        %s897 = scalar_lea.sflag [#allocation3], %s896
        %s898 = sand.u32 %s320, 1
        %s899 = smul.addr %s898, 64
        %s900 = scalar_lea.vmem [#allocation12], %s899
        // Predicated region
        $region129: #{tpu_custom_call.1} parent=99 // pred_check
          %p901 = pneg %p333
        $region130: #{tpu_custom_call.1} parent=99 // pred_check_branch
          %903 = sbr.rel (%p901) target = $region132
        $region131: #{tpu_custom_call.1} parent=99 // pred_region
          %904 = dma.done %s897, 1024
        $region132: #{tpu_custom_call.1} parent=99 // pred_fallthru
          _
        %s905 = sand.u32 %s36, 1
        %s906 = scalar_lea.sflag [#allocation3], %s905
        %s907 = sand.u32 %s424, 1
        %s908 = smul.addr %s907, 64
        %s909 = scalar_lea.vmem [#allocation13], %s908
        // Predicated region
        $region133: #{tpu_custom_call.1} parent=99 // pred_check
          %p910 = pneg %p437
        $region134: #{tpu_custom_call.1} parent=99 // pred_check_branch
          %912 = sbr.rel (%p910) target = $region136
        $region135: #{tpu_custom_call.1} parent=99 // pred_region
          %913 = dma.done %s906, 1024
        $region136: #{tpu_custom_call.1} parent=99 // pred_fallthru
          _
        %s914 = sand.u32 %s36, 1
        %s915 = scalar_lea.sflag [#allocation3], %s914
        %s916 = sand.u32 %s450, 1
        %s917 = smul.addr %s916, 64
        %s918 = scalar_lea.vmem [#allocation14], %s917
        // Predicated region
        $region137: #{tpu_custom_call.1} parent=99 // pred_check
          %p919 = pneg %p463
        $region138: #{tpu_custom_call.1} parent=99 // pred_check_branch
          %921 = sbr.rel (%p919) target = $region140
        $region139: #{tpu_custom_call.1} parent=99 // pred_region
          %922 = dma.done %s915, 1024
        $region140: #{tpu_custom_call.1} parent=99 // pred_fallthru
          _
        %p923 = pneg %p52
        %p924 = pneg %p49
        %p925 = pneg %p73
        %p926 = pneg %p70
        %s927 = sand.u32 %s36, 1
        %s928 = scalar_lea.sflag [#allocation3], %s927
        %s929 = sand.u32 %s86, 1
        %s930 = smul.addr %s929, 64
        %s931 = scalar_lea.vmem [#allocation7], %s930
        %p932 = pneg %p99
        %p933 = pneg %p96
        %s934 = sand.u32 %s36, 1
        %s935 = scalar_lea.sflag [#allocation3], %s934
        %s936 = sand.u32 %s112, 1
        %s937 = smul.addr %s936, 64
        %s938 = scalar_lea.vmem [#allocation8], %s937
        %p939 = pneg %p125
        %p940 = pneg %p122
        %s941 = sand.u32 %s36, 1
        %s942 = scalar_lea.sflag [#allocation3], %s941
        %s943 = sand.u32 %s138, 1
        %s944 = smul.addr %s943, 64
        %s945 = scalar_lea.vmem [#allocation9], %s944
        %p946 = pneg %p151
        %p947 = pneg %p148
        %s948 = sand.u32 %s36, 1
        %s949 = scalar_lea.sflag [#allocation3], %s948
        %s950 = sand.u32 %s164, 1
        %s951 = smul.addr %s950, 64
        %s952 = scalar_lea.vmem [#allocation10], %s951
        %p953 = pneg %p177
        %p954 = pneg %p174
        %p955 = scmp.lt.s32.totalorder %s36, 1
        %s956 = scalar_select %p955, %s36, 1
        %s957 = scalar_lea.vmem %s6, %s956
        %p958 = pneg %p203
        %p959 = pneg %p200
        %p960 = scmp.lt.s32.totalorder %s36, 1
        %s961 = scalar_select %p960, %s36, 1
        %s962 = scalar_lea.vmem %s7, %s961
        %p963 = pneg %p229
        %p964 = pneg %p226
        %p965 = scmp.lt.s32.totalorder %s36, 1
        %s966 = scalar_select %p965, %s36, 1
        %s967 = scalar_lea.vmem %s8, %s966
        %p968 = pneg %p255
        %p969 = pneg %p252
        %p970 = scmp.lt.s32.totalorder %s36, 1
        %s971 = scalar_select %p970, %s36, 1
        %s972 = scalar_lea.vmem %s9, %s971
        %p973 = pneg %p281
        %p974 = pneg %p278
        %s975 = sand.u32 %s36, 1
        %s976 = scalar_lea.sflag [#allocation3], %s975
        %s977 = sand.u32 %s294, 1
        %s978 = smul.addr %s977, 64
        %s979 = scalar_lea.vmem [#allocation11], %s978
        %p980 = pneg %p307
        %p981 = pneg %p304
        %s982 = sand.u32 %s36, 1
        %s983 = scalar_lea.sflag [#allocation3], %s982
        %s984 = sand.u32 %s320, 1
        %s985 = smul.addr %s984, 64
        %s986 = scalar_lea.vmem [#allocation12], %s985
        %p987 = pneg %p333
        %p988 = pneg %p330
        %p989 = scmp.lt.s32.totalorder %s36, 1
        %s990 = scalar_select %p989, %s36, 1
        %s991 = scalar_lea.vmem %s12, %s990
        %p992 = pneg %p359
        %p993 = pneg %p356
        %p994 = scmp.lt.s32.totalorder %s36, 1
        %s995 = scalar_select %p994, %s36, 1
        %s996 = scalar_lea.vmem %s13, %s995
        %p997 = pneg %p385
        %p998 = pneg %p382
        %p999 = scmp.lt.s32.totalorder %s36, 1
        %s1000 = scalar_select %p999, %s36, 1
        %s1001 = scalar_lea.vmem %s14, %s1000
        %p1002 = pneg %p411
        %p1003 = pneg %p408
        %s1004 = sand.u32 %s36, 1
        %s1005 = scalar_lea.sflag [#allocation3], %s1004
        %s1006 = sand.u32 %s424, 1
        %s1007 = smul.addr %s1006, 64
        %s1008 = scalar_lea.vmem [#allocation13], %s1007
        %p1009 = pneg %p437
        %p1010 = pneg %p434
        %s1011 = sand.u32 %s36, 1
        %s1012 = scalar_lea.sflag [#allocation3], %s1011
        %s1013 = sand.u32 %s450, 1
        %s1014 = smul.addr %s1013, 64
        %s1015 = scalar_lea.vmem [#allocation14], %s1014
        %p1016 = pneg %p463
        %p1017 = pneg %p460
        %p1018 = scmp.lt.s32.totalorder %s36, 1
        %s1019 = scalar_select %p1018, %s36, 1
        %s1020 = scalar_lea.vmem %s17, %s1019
        %p1021 = pneg %p489
        %p1022 = pneg %p486
        %p1023 = scmp.lt.s32.totalorder %s36, 1
        %s1024 = scalar_select %p1023, %s36, 1
        %s1025 = scalar_lea.vmem %s18, %s1024
        %p1026 = pneg %p515
        %p1027 = pneg %p512
        %p1028 = scmp.lt.s32.totalorder %s36, 1
        %s1029 = scalar_select %p1028, %s36, 1
        %s1030 = scalar_lea.vmem %s19, %s1029
        %p1031 = pneg %p541
        %p1032 = pneg %p538
        %p1033 = pneg %p567
        %p1034 = pneg %p564
        %s1035 = sand.u32 %s554, 1
        %s1036 = scalar_lea.sflag [#allocation4], %s1035
        %s1037 = sand.u32 %s554, 1
        %s1038 = smul.addr %s1037, 8
        %s1039 = scalar_lea.vmem [#allocation15], %s1038
        %p1040 = scmp.lt.s32.totalorder %s36, 1
        %s1041 = scalar_select %p1040, %s36, 1
        %s1042 = scalar_lea.vmem %s6, %s1041
        %p1043 = scmp.lt.s32.totalorder %s36, 1
        %s1044 = scalar_select %p1043, %s36, 1
        %s1045 = scalar_lea.vmem %s7, %s1044
        %p1046 = scmp.lt.s32.totalorder %s36, 1
        %s1047 = scalar_select %p1046, %s36, 1
        %s1048 = scalar_lea.vmem %s8, %s1047
        %p1049 = scmp.lt.s32.totalorder %s36, 1
        %s1050 = scalar_select %p1049, %s36, 1
        %s1051 = scalar_lea.vmem %s9, %s1050
        %p1052 = scmp.lt.s32.totalorder %s36, 1
        %s1053 = scalar_select %p1052, %s36, 1
        %s1054 = scalar_lea.vmem %s12, %s1053
        %p1055 = scmp.lt.s32.totalorder %s36, 1
        %s1056 = scalar_select %p1055, %s36, 1
        %s1057 = scalar_lea.vmem %s13, %s1056
        %p1058 = scmp.lt.s32.totalorder %s36, 1
        %s1059 = scalar_select %p1058, %s36, 1
        %s1060 = scalar_lea.vmem %s14, %s1059
        %p1061 = scmp.lt.s32.totalorder %s36, 1
        %s1062 = scalar_select %p1061, %s36, 1
        %s1063 = scalar_lea.vmem %s17, %s1062
        %p1064 = scmp.lt.s32.totalorder %s36, 1
        %s1065 = scalar_select %p1064, %s36, 1
        %s1066 = scalar_lea.vmem %s18, %s1065
        %p1067 = scmp.lt.s32.totalorder %s36, 1
        %s1068 = scalar_select %p1067, %s36, 1
        %s1069 = scalar_lea.vmem %s19, %s1068
        %v1071 = vld [vmem:[#allocation2] sm:$0xff]
        %v1072 = vld [vmem:[#allocation5] sm:$0xff]
        %v1073 = vpack.c.bf16 %v1071, %v1071
        %v1074 = vld [vmem:[%s1042] sm:$0x1]
        %v1076 = vlaneseq
        %v1077 = vshrl.u32 %v1076, 7
        %v1078 = vsub.s32 0, %v1077
        %v1079 = vrot.slane %v1074, %v1078
        %v1081 = vmul.f32 %v1071, %v1079
        %v1082 = vpack.c.bf16 %v1081, %v1081
        %v1083 = vld [vmem:[%s855] sm:$0xf]
        %v1084 = vld [vmem:[%s855 + $0x4] sm:$0xf]
        %v1085 = vld [vmem:[%s855 + $0x8] sm:$0xf]
        %v1086 = vld [vmem:[%s855 + $0xc] sm:$0xf]
        %v1087 = vld [vmem:[%s855 + $0x10] sm:$0xf]
        %v1088 = vld [vmem:[%s855 + $0x14] sm:$0xf]
        %v1089 = vld [vmem:[%s855 + $0x18] sm:$0xf]
        %v1090 = vld [vmem:[%s855 + $0x1c] sm:$0xf]
        %v1091 = vld [vmem:[%s855 + $0x20] sm:$0xf]
        %v1092 = vld [vmem:[%s855 + $0x24] sm:$0xf]
        %v1093 = vld [vmem:[%s855 + $0x28] sm:$0xf]
        %v1094 = vld [vmem:[%s855 + $0x2c] sm:$0xf]
        %v1095 = vld [vmem:[%s855 + $0x30] sm:$0xf]
        %v1096 = vld [vmem:[%s855 + $0x34] sm:$0xf]
        %v1097 = vld [vmem:[%s855 + $0x38] sm:$0xf]
        %v1098 = vld [vmem:[%s855 + $0x3c] sm:$0xf]
        %v1099 = vld [vmem:[%s864] sm:$0xf]
        %v1100 = vld [vmem:[%s864 + $0x4] sm:$0xf]
        %v1101 = vld [vmem:[%s864 + $0x8] sm:$0xf]
        %v1102 = vld [vmem:[%s864 + $0xc] sm:$0xf]
        %v1103 = vld [vmem:[%s864 + $0x10] sm:$0xf]
        %v1104 = vld [vmem:[%s864 + $0x14] sm:$0xf]
        %v1105 = vld [vmem:[%s864 + $0x18] sm:$0xf]
        %v1106 = vld [vmem:[%s864 + $0x1c] sm:$0xf]
        %v1107 = vld [vmem:[%s864 + $0x20] sm:$0xf]
        %v1108 = vld [vmem:[%s864 + $0x24] sm:$0xf]
        %v1109 = vld [vmem:[%s864 + $0x28] sm:$0xf]
        %v1110 = vld [vmem:[%s864 + $0x2c] sm:$0xf]
        %v1111 = vld [vmem:[%s864 + $0x30] sm:$0xf]
        %v1112 = vld [vmem:[%s864 + $0x34] sm:$0xf]
        %v1113 = vld [vmem:[%s864 + $0x38] sm:$0xf]
        %v1114 = vld [vmem:[%s864 + $0x3c] sm:$0xf]
        %v1131 = vunpack.c.l.b16 %v1099
        %v1132 = vunpack.c.l.b16 %v1100
        %v1133 = vunpack.c.l.b16 %v1101
        %v1134 = vunpack.c.l.b16 %v1102
        %v1135 = vunpack.c.l.b16 %v1103
        %v1136 = vunpack.c.l.b16 %v1104
        %v1137 = vunpack.c.l.b16 %v1105
        %v1138 = vunpack.c.l.b16 %v1106
        %v1139 = vunpack.c.l.b16 %v1107
        %v1140 = vunpack.c.l.b16 %v1108
        %v1141 = vunpack.c.l.b16 %v1109
        %v1142 = vunpack.c.l.b16 %v1110
        %v1143 = vunpack.c.l.b16 %v1111
        %v1144 = vunpack.c.l.b16 %v1112
        %v1145 = vunpack.c.l.b16 %v1113
        %v1146 = vunpack.c.l.b16 %v1114
        %v1147 = vpack.c.b16 %v1132, %v1131
        %v1148 = vpack.c.b16 %v1134, %v1133
        %v1149 = vpack.c.b16 %v1136, %v1135
        %v1150 = vpack.c.b16 %v1138, %v1137
        %v1151 = vpack.c.b16 %v1140, %v1139
        %v1152 = vpack.c.b16 %v1142, %v1141
        %v1153 = vpack.c.b16 %v1144, %v1143
        %v1154 = vpack.c.b16 %v1146, %v1145
        %1163 = vmatprep.subr.bf16.mxu0 0
        %1164 = vmatpush1.bf16.msra.mxu0 %v1154
        %1165 = vmatprep.subr.bf16.mxu0 0
        %1166 = vmatpush1.bf16.msra.mxu0 %v1153
        %1167 = vmatprep.subr.bf16.mxu0 0
        %1168 = vmatpush1.bf16.msra.mxu0 %v1152
        %1169 = vmatprep.subr.bf16.mxu0 0
        %1170 = vmatpush1.bf16.msra.mxu0 %v1151
        %1171 = vmatprep.subr.bf16.mxu0 0
        %1172 = vmatpush1.bf16.msra.mxu0 %v1150
        %1173 = vmatprep.subr.bf16.mxu0 0
        %1174 = vmatpush1.bf16.msra.mxu0 %v1149
        %1175 = vmatprep.subr.bf16.mxu0 0
        %1176 = vmatpush1.bf16.msra.mxu0 %v1148
        %1177 = vmatprep.subr.bf16.mxu0 0
        %1178 = vmatpush1.bf16.msra.mxu0 %v1147
        %1179 = vmatprep.subr.bf16.mxu0 0
        %1180 = vmatpush2.bf16.msra.mxu0 0
        %1181 = vmatprep.subr.bf16.mxu0 0
        %1182 = vmatpush2.bf16.msra.mxu0 0
        %1183 = vmatprep.subr.bf16.mxu0 0
        %1184 = vmatpush2.bf16.msra.mxu0 0
        %1185 = vmatprep.subr.bf16.mxu0 0
        %1186 = vmatpush2.bf16.msra.mxu0 0
        %1187 = vmatprep.subr.bf16.mxu0 0
        %1188 = vmatpush2.bf16.msra.mxu0 0
        %1189 = vmatprep.subr.bf16.mxu0 0
        %1190 = vmatpush2.bf16.msra.mxu0 0
        %1191 = vmatprep.subr.bf16.mxu0 0
        %1192 = vmatpush2.bf16.msra.mxu0 0
        %1193 = vmatprep.subr.bf16.mxu0 0
        %1194 = vmatpush2.bf16.msra.mxu0 0
        %1195 = vmatprep.mubr.bf16.mxu0 0
        %1196 = vmatmul.mubr.bf16.gmra.mxu0 %v1082
        %v1197 = vpop.f32.mrf.mxu0
        %v1198 = vadd.f32 0.0, %v1197
        %v1199 = vpop.f32.mrf.mxu0
        %v1200 = vpop.f32.mrf.mxu0
        %v1201 = vpop.f32.mrf.mxu0
        %1202 = vdwg.mxu0
        %v1203 = vld [vmem:[%s1048] sm:$0x1]
        %v1205 = vlaneseq
        %v1206 = vshrl.u32 %v1205, 7
        %v1207 = vsub.s32 0, %v1206
        %v1208 = vrot.slane %v1203, %v1207
        %v1210 = vmul.f32 %v1198, %v1208
        %v1227 = vunpack.c.l.b16 %v1083
        %v1228 = vunpack.c.l.b16 %v1084
        %v1229 = vunpack.c.l.b16 %v1085
        %v1230 = vunpack.c.l.b16 %v1086
        %v1231 = vunpack.c.l.b16 %v1087
        %v1232 = vunpack.c.l.b16 %v1088
        %v1233 = vunpack.c.l.b16 %v1089
        %v1234 = vunpack.c.l.b16 %v1090
        %v1235 = vunpack.c.l.b16 %v1091
        %v1236 = vunpack.c.l.b16 %v1092
        %v1237 = vunpack.c.l.b16 %v1093
        %v1238 = vunpack.c.l.b16 %v1094
        %v1239 = vunpack.c.l.b16 %v1095
        %v1240 = vunpack.c.l.b16 %v1096
        %v1241 = vunpack.c.l.b16 %v1097
        %v1242 = vunpack.c.l.b16 %v1098
        %v1243 = vpack.c.b16 %v1228, %v1227
        %v1244 = vpack.c.b16 %v1230, %v1229
        %v1245 = vpack.c.b16 %v1232, %v1231
        %v1246 = vpack.c.b16 %v1234, %v1233
        %v1247 = vpack.c.b16 %v1236, %v1235
        %v1248 = vpack.c.b16 %v1238, %v1237
        %v1249 = vpack.c.b16 %v1240, %v1239
        %v1250 = vpack.c.b16 %v1242, %v1241
        %1259 = vmatprep.subr.bf16.mxu0 0
        %1260 = vmatpush1.bf16.msra.mxu0 %v1250
        %1261 = vmatprep.subr.bf16.mxu0 0
        %1262 = vmatpush1.bf16.msra.mxu0 %v1249
        %1263 = vmatprep.subr.bf16.mxu0 0
        %1264 = vmatpush1.bf16.msra.mxu0 %v1248
        %1265 = vmatprep.subr.bf16.mxu0 0
        %1266 = vmatpush1.bf16.msra.mxu0 %v1247
        %1267 = vmatprep.subr.bf16.mxu0 0
        %1268 = vmatpush1.bf16.msra.mxu0 %v1246
        %1269 = vmatprep.subr.bf16.mxu0 0
        %1270 = vmatpush1.bf16.msra.mxu0 %v1245
        %1271 = vmatprep.subr.bf16.mxu0 0
        %1272 = vmatpush1.bf16.msra.mxu0 %v1244
        %1273 = vmatprep.subr.bf16.mxu0 0
        %1274 = vmatpush1.bf16.msra.mxu0 %v1243
        %1275 = vmatprep.subr.bf16.mxu0 0
        %1276 = vmatpush2.bf16.msra.mxu0 0
        %1277 = vmatprep.subr.bf16.mxu0 0
        %1278 = vmatpush2.bf16.msra.mxu0 0
        %1279 = vmatprep.subr.bf16.mxu0 0
        %1280 = vmatpush2.bf16.msra.mxu0 0
        %1281 = vmatprep.subr.bf16.mxu0 0
        %1282 = vmatpush2.bf16.msra.mxu0 0
        %1283 = vmatprep.subr.bf16.mxu0 0
        %1284 = vmatpush2.bf16.msra.mxu0 0
        %1285 = vmatprep.subr.bf16.mxu0 0
        %1286 = vmatpush2.bf16.msra.mxu0 0
        %1287 = vmatprep.subr.bf16.mxu0 0
        %1288 = vmatpush2.bf16.msra.mxu0 0
        %1289 = vmatprep.subr.bf16.mxu0 0
        %1290 = vmatpush2.bf16.msra.mxu0 0
        %1291 = vmatprep.mubr.bf16.mxu0 0
        %1292 = vmatmul.mubr.bf16.gmra.mxu0 %v1073
        %v1293 = vpop.f32.mrf.mxu0
        %v1294 = vadd.f32 %v1210, %v1293
        %v1295 = vpop.f32.mrf.mxu0
        %v1296 = vpop.f32.mrf.mxu0
        %v1297 = vpop.f32.mrf.mxu0
        %1298 = vdwg.mxu0
        %v1299 = vpack.c.bf16 %v1072, %v1072
        %v1300 = vld [vmem:[%s1045] sm:$0x1]
        %v1302 = vlaneseq
        %v1303 = vshrl.u32 %v1302, 7
        %v1304 = vsub.s32 0, %v1303
        %v1305 = vrot.slane %v1300, %v1304
        %v1307 = vmul.f32 %v1072, %v1305
        %v1308 = vpack.c.bf16 %v1307, %v1307
        %v1309 = vld [vmem:[%s873] sm:$0xf]
        %v1310 = vld [vmem:[%s873 + $0x4] sm:$0xf]
        %v1311 = vld [vmem:[%s873 + $0x8] sm:$0xf]
        %v1312 = vld [vmem:[%s873 + $0xc] sm:$0xf]
        %v1313 = vld [vmem:[%s873 + $0x10] sm:$0xf]
        %v1314 = vld [vmem:[%s873 + $0x14] sm:$0xf]
        %v1315 = vld [vmem:[%s873 + $0x18] sm:$0xf]
        %v1316 = vld [vmem:[%s873 + $0x1c] sm:$0xf]
        %v1317 = vld [vmem:[%s873 + $0x20] sm:$0xf]
        %v1318 = vld [vmem:[%s873 + $0x24] sm:$0xf]
        %v1319 = vld [vmem:[%s873 + $0x28] sm:$0xf]
        %v1320 = vld [vmem:[%s873 + $0x2c] sm:$0xf]
        %v1321 = vld [vmem:[%s873 + $0x30] sm:$0xf]
        %v1322 = vld [vmem:[%s873 + $0x34] sm:$0xf]
        %v1323 = vld [vmem:[%s873 + $0x38] sm:$0xf]
        %v1324 = vld [vmem:[%s873 + $0x3c] sm:$0xf]
        %v1325 = vld [vmem:[%s882] sm:$0xf]
        %v1326 = vld [vmem:[%s882 + $0x4] sm:$0xf]
        %v1327 = vld [vmem:[%s882 + $0x8] sm:$0xf]
        %v1328 = vld [vmem:[%s882 + $0xc] sm:$0xf]
        %v1329 = vld [vmem:[%s882 + $0x10] sm:$0xf]
        %v1330 = vld [vmem:[%s882 + $0x14] sm:$0xf]
        %v1331 = vld [vmem:[%s882 + $0x18] sm:$0xf]
        %v1332 = vld [vmem:[%s882 + $0x1c] sm:$0xf]
        %v1333 = vld [vmem:[%s882 + $0x20] sm:$0xf]
        %v1334 = vld [vmem:[%s882 + $0x24] sm:$0xf]
        %v1335 = vld [vmem:[%s882 + $0x28] sm:$0xf]
        %v1336 = vld [vmem:[%s882 + $0x2c] sm:$0xf]
        %v1337 = vld [vmem:[%s882 + $0x30] sm:$0xf]
        %v1338 = vld [vmem:[%s882 + $0x34] sm:$0xf]
        %v1339 = vld [vmem:[%s882 + $0x38] sm:$0xf]
        %v1340 = vld [vmem:[%s882 + $0x3c] sm:$0xf]
        %v1357 = vunpack.c.l.b16 %v1325
        %v1358 = vunpack.c.l.b16 %v1326
        %v1359 = vunpack.c.l.b16 %v1327
        %v1360 = vunpack.c.l.b16 %v1328
        %v1361 = vunpack.c.l.b16 %v1329
        %v1362 = vunpack.c.l.b16 %v1330
        %v1363 = vunpack.c.l.b16 %v1331
        %v1364 = vunpack.c.l.b16 %v1332
        %v1365 = vunpack.c.l.b16 %v1333
        %v1366 = vunpack.c.l.b16 %v1334
        %v1367 = vunpack.c.l.b16 %v1335
        %v1368 = vunpack.c.l.b16 %v1336
        %v1369 = vunpack.c.l.b16 %v1337
        %v1370 = vunpack.c.l.b16 %v1338
        %v1371 = vunpack.c.l.b16 %v1339
        %v1372 = vunpack.c.l.b16 %v1340
        %v1373 = vpack.c.b16 %v1358, %v1357
        %v1374 = vpack.c.b16 %v1360, %v1359
        %v1375 = vpack.c.b16 %v1362, %v1361
        %v1376 = vpack.c.b16 %v1364, %v1363
        %v1377 = vpack.c.b16 %v1366, %v1365
        %v1378 = vpack.c.b16 %v1368, %v1367
        %v1379 = vpack.c.b16 %v1370, %v1369
        %v1380 = vpack.c.b16 %v1372, %v1371
        %1389 = vmatprep.subr.bf16.mxu0 0
        %1390 = vmatpush1.bf16.msra.mxu0 %v1380
        %1391 = vmatprep.subr.bf16.mxu0 0
        %1392 = vmatpush1.bf16.msra.mxu0 %v1379
        %1393 = vmatprep.subr.bf16.mxu0 0
        %1394 = vmatpush1.bf16.msra.mxu0 %v1378
        %1395 = vmatprep.subr.bf16.mxu0 0
        %1396 = vmatpush1.bf16.msra.mxu0 %v1377
        %1397 = vmatprep.subr.bf16.mxu0 0
        %1398 = vmatpush1.bf16.msra.mxu0 %v1376
        %1399 = vmatprep.subr.bf16.mxu0 0
        %1400 = vmatpush1.bf16.msra.mxu0 %v1375
        %1401 = vmatprep.subr.bf16.mxu0 0
        %1402 = vmatpush1.bf16.msra.mxu0 %v1374
        %1403 = vmatprep.subr.bf16.mxu0 0
        %1404 = vmatpush1.bf16.msra.mxu0 %v1373
        %1405 = vmatprep.subr.bf16.mxu0 0
        %1406 = vmatpush2.bf16.msra.mxu0 0
        %1407 = vmatprep.subr.bf16.mxu0 0
        %1408 = vmatpush2.bf16.msra.mxu0 0
        %1409 = vmatprep.subr.bf16.mxu0 0
        %1410 = vmatpush2.bf16.msra.mxu0 0
        %1411 = vmatprep.subr.bf16.mxu0 0
        %1412 = vmatpush2.bf16.msra.mxu0 0
        %1413 = vmatprep.subr.bf16.mxu0 0
        %1414 = vmatpush2.bf16.msra.mxu0 0
        %1415 = vmatprep.subr.bf16.mxu0 0
        %1416 = vmatpush2.bf16.msra.mxu0 0
        %1417 = vmatprep.subr.bf16.mxu0 0
        %1418 = vmatpush2.bf16.msra.mxu0 0
        %1419 = vmatprep.subr.bf16.mxu0 0
        %1420 = vmatpush2.bf16.msra.mxu0 0
        %1421 = vmatprep.mubr.bf16.mxu0 0
        %1422 = vmatmul.mubr.bf16.gmra.mxu0 %v1308
        %v1423 = vpop.f32.mrf.mxu0
        %v1424 = vadd.f32 0.0, %v1423
        %v1425 = vpop.f32.mrf.mxu0
        %v1426 = vpop.f32.mrf.mxu0
        %v1427 = vpop.f32.mrf.mxu0
        %1428 = vdwg.mxu0
        %v1429 = vmul.f32 %v1424, %v1208
        %v1446 = vunpack.c.l.b16 %v1309
        %v1447 = vunpack.c.l.b16 %v1310
        %v1448 = vunpack.c.l.b16 %v1311
        %v1449 = vunpack.c.l.b16 %v1312
        %v1450 = vunpack.c.l.b16 %v1313
        %v1451 = vunpack.c.l.b16 %v1314
        %v1452 = vunpack.c.l.b16 %v1315
        %v1453 = vunpack.c.l.b16 %v1316
        %v1454 = vunpack.c.l.b16 %v1317
        %v1455 = vunpack.c.l.b16 %v1318
        %v1456 = vunpack.c.l.b16 %v1319
        %v1457 = vunpack.c.l.b16 %v1320
        %v1458 = vunpack.c.l.b16 %v1321
        %v1459 = vunpack.c.l.b16 %v1322
        %v1460 = vunpack.c.l.b16 %v1323
        %v1461 = vunpack.c.l.b16 %v1324
        %v1462 = vpack.c.b16 %v1447, %v1446
        %v1463 = vpack.c.b16 %v1449, %v1448
        %v1464 = vpack.c.b16 %v1451, %v1450
        %v1465 = vpack.c.b16 %v1453, %v1452
        %v1466 = vpack.c.b16 %v1455, %v1454
        %v1467 = vpack.c.b16 %v1457, %v1456
        %v1468 = vpack.c.b16 %v1459, %v1458
        %v1469 = vpack.c.b16 %v1461, %v1460
        %1478 = vmatprep.subr.bf16.mxu0 0
        %1479 = vmatpush1.bf16.msra.mxu0 %v1469
        %1480 = vmatprep.subr.bf16.mxu0 0
        %1481 = vmatpush1.bf16.msra.mxu0 %v1468
        %1482 = vmatprep.subr.bf16.mxu0 0
        %1483 = vmatpush1.bf16.msra.mxu0 %v1467
        %1484 = vmatprep.subr.bf16.mxu0 0
        %1485 = vmatpush1.bf16.msra.mxu0 %v1466
        %1486 = vmatprep.subr.bf16.mxu0 0
        %1487 = vmatpush1.bf16.msra.mxu0 %v1465
        %1488 = vmatprep.subr.bf16.mxu0 0
        %1489 = vmatpush1.bf16.msra.mxu0 %v1464
        %1490 = vmatprep.subr.bf16.mxu0 0
        %1491 = vmatpush1.bf16.msra.mxu0 %v1463
        %1492 = vmatprep.subr.bf16.mxu0 0
        %1493 = vmatpush1.bf16.msra.mxu0 %v1462
        %1494 = vmatprep.subr.bf16.mxu0 0
        %1495 = vmatpush2.bf16.msra.mxu0 0
        %1496 = vmatprep.subr.bf16.mxu0 0
        %1497 = vmatpush2.bf16.msra.mxu0 0
        %1498 = vmatprep.subr.bf16.mxu0 0
        %1499 = vmatpush2.bf16.msra.mxu0 0
        %1500 = vmatprep.subr.bf16.mxu0 0
        %1501 = vmatpush2.bf16.msra.mxu0 0
        %1502 = vmatprep.subr.bf16.mxu0 0
        %1503 = vmatpush2.bf16.msra.mxu0 0
        %1504 = vmatprep.subr.bf16.mxu0 0
        %1505 = vmatpush2.bf16.msra.mxu0 0
        %1506 = vmatprep.subr.bf16.mxu0 0
        %1507 = vmatpush2.bf16.msra.mxu0 0
        %1508 = vmatprep.subr.bf16.mxu0 0
        %1509 = vmatpush2.bf16.msra.mxu0 0
        %1510 = vmatprep.mubr.bf16.mxu0 0
        %1511 = vmatmul.mubr.bf16.gmra.mxu0 %v1299
        %v1512 = vpop.f32.mrf.mxu0
        %v1513 = vadd.f32 %v1429, %v1512
        %v1514 = vpop.f32.mrf.mxu0
        %v1515 = vpop.f32.mrf.mxu0
        %v1516 = vpop.f32.mrf.mxu0
        %1517 = vdwg.mxu0
        %v1518 = vadd.f32 %v1294, %v1513
        %v1519 = vld [vmem:[%s1051] sm:$0x1]
        %v1521 = vlaneseq
        %v1522 = vshrl.u32 %v1521, 7
        %v1523 = vsub.s32 0, %v1522
        %v1524 = vrot.slane %v1519, %v1523
        %v1526 = vadd.f32 %v1518, %v1524
        %v1527 = vmax.f32 %v1526, 0.0
        %v1528 = vpack.c.bf16 %v1527, %v1527
        %v1529 = vld [vmem:[%s1054] sm:$0x1]
        %v1531 = vlaneseq
        %v1532 = vshrl.u32 %v1531, 7
        %v1533 = vsub.s32 0, %v1532
        %v1534 = vrot.slane %v1529, %v1533
        %v1536 = vmul.f32 %v1527, %v1534
        %v1537 = vpack.c.bf16 %v1536, %v1536
        %v1538 = vld [vmem:[%s891] sm:$0xf]
        %v1539 = vld [vmem:[%s891 + $0x4] sm:$0xf]
        %v1540 = vld [vmem:[%s891 + $0x8] sm:$0xf]
        %v1541 = vld [vmem:[%s891 + $0xc] sm:$0xf]
        %v1542 = vld [vmem:[%s891 + $0x10] sm:$0xf]
        %v1543 = vld [vmem:[%s891 + $0x14] sm:$0xf]
        %v1544 = vld [vmem:[%s891 + $0x18] sm:$0xf]
        %v1545 = vld [vmem:[%s891 + $0x1c] sm:$0xf]
        %v1546 = vld [vmem:[%s891 + $0x20] sm:$0xf]
        %v1547 = vld [vmem:[%s891 + $0x24] sm:$0xf]
        %v1548 = vld [vmem:[%s891 + $0x28] sm:$0xf]
        %v1549 = vld [vmem:[%s891 + $0x2c] sm:$0xf]
        %v1550 = vld [vmem:[%s891 + $0x30] sm:$0xf]
        %v1551 = vld [vmem:[%s891 + $0x34] sm:$0xf]
        %v1552 = vld [vmem:[%s891 + $0x38] sm:$0xf]
        %v1553 = vld [vmem:[%s891 + $0x3c] sm:$0xf]
        %v1554 = vld [vmem:[%s900] sm:$0xf]
        %v1555 = vld [vmem:[%s900 + $0x4] sm:$0xf]
        %v1556 = vld [vmem:[%s900 + $0x8] sm:$0xf]
        %v1557 = vld [vmem:[%s900 + $0xc] sm:$0xf]
        %v1558 = vld [vmem:[%s900 + $0x10] sm:$0xf]
        %v1559 = vld [vmem:[%s900 + $0x14] sm:$0xf]
        %v1560 = vld [vmem:[%s900 + $0x18] sm:$0xf]
        %v1561 = vld [vmem:[%s900 + $0x1c] sm:$0xf]
        %v1562 = vld [vmem:[%s900 + $0x20] sm:$0xf]
        %v1563 = vld [vmem:[%s900 + $0x24] sm:$0xf]
        %v1564 = vld [vmem:[%s900 + $0x28] sm:$0xf]
        %v1565 = vld [vmem:[%s900 + $0x2c] sm:$0xf]
        %v1566 = vld [vmem:[%s900 + $0x30] sm:$0xf]
        %v1567 = vld [vmem:[%s900 + $0x34] sm:$0xf]
        %v1568 = vld [vmem:[%s900 + $0x38] sm:$0xf]
        %v1569 = vld [vmem:[%s900 + $0x3c] sm:$0xf]
        %v1586 = vunpack.c.l.b16 %v1554
        %v1587 = vunpack.c.l.b16 %v1555
        %v1588 = vunpack.c.l.b16 %v1556
        %v1589 = vunpack.c.l.b16 %v1557
        %v1590 = vunpack.c.l.b16 %v1558
        %v1591 = vunpack.c.l.b16 %v1559
        %v1592 = vunpack.c.l.b16 %v1560
        %v1593 = vunpack.c.l.b16 %v1561
        %v1594 = vunpack.c.l.b16 %v1562
        %v1595 = vunpack.c.l.b16 %v1563
        %v1596 = vunpack.c.l.b16 %v1564
        %v1597 = vunpack.c.l.b16 %v1565
        %v1598 = vunpack.c.l.b16 %v1566
        %v1599 = vunpack.c.l.b16 %v1567
        %v1600 = vunpack.c.l.b16 %v1568
        %v1601 = vunpack.c.l.b16 %v1569
        %v1602 = vpack.c.b16 %v1587, %v1586
        %v1603 = vpack.c.b16 %v1589, %v1588
        %v1604 = vpack.c.b16 %v1591, %v1590
        %v1605 = vpack.c.b16 %v1593, %v1592
        %v1606 = vpack.c.b16 %v1595, %v1594
        %v1607 = vpack.c.b16 %v1597, %v1596
        %v1608 = vpack.c.b16 %v1599, %v1598
        %v1609 = vpack.c.b16 %v1601, %v1600
        %1618 = vmatprep.subr.bf16.mxu0 0
        %1619 = vmatpush1.bf16.msra.mxu0 %v1609
        %1620 = vmatprep.subr.bf16.mxu0 0
        %1621 = vmatpush1.bf16.msra.mxu0 %v1608
        %1622 = vmatprep.subr.bf16.mxu0 0
        %1623 = vmatpush1.bf16.msra.mxu0 %v1607
        %1624 = vmatprep.subr.bf16.mxu0 0
        %1625 = vmatpush1.bf16.msra.mxu0 %v1606
        %1626 = vmatprep.subr.bf16.mxu0 0
        %1627 = vmatpush1.bf16.msra.mxu0 %v1605
        %1628 = vmatprep.subr.bf16.mxu0 0
        %1629 = vmatpush1.bf16.msra.mxu0 %v1604
        %1630 = vmatprep.subr.bf16.mxu0 0
        %1631 = vmatpush1.bf16.msra.mxu0 %v1603
        %1632 = vmatprep.subr.bf16.mxu0 0
        %1633 = vmatpush1.bf16.msra.mxu0 %v1602
        %1634 = vmatprep.subr.bf16.mxu0 0
        %1635 = vmatpush2.bf16.msra.mxu0 0
        %1636 = vmatprep.subr.bf16.mxu0 0
        %1637 = vmatpush2.bf16.msra.mxu0 0
        %1638 = vmatprep.subr.bf16.mxu0 0
        %1639 = vmatpush2.bf16.msra.mxu0 0
        %1640 = vmatprep.subr.bf16.mxu0 0
        %1641 = vmatpush2.bf16.msra.mxu0 0
        %1642 = vmatprep.subr.bf16.mxu0 0
        %1643 = vmatpush2.bf16.msra.mxu0 0
        %1644 = vmatprep.subr.bf16.mxu0 0
        %1645 = vmatpush2.bf16.msra.mxu0 0
        %1646 = vmatprep.subr.bf16.mxu0 0
        %1647 = vmatpush2.bf16.msra.mxu0 0
        %1648 = vmatprep.subr.bf16.mxu0 0
        %1649 = vmatpush2.bf16.msra.mxu0 0
        %1650 = vmatprep.mubr.bf16.mxu0 0
        %1651 = vmatmul.mubr.bf16.gmra.mxu0 %v1537
        %v1652 = vpop.f32.mrf.mxu0
        %v1653 = vadd.f32 0.0, %v1652
        %v1654 = vpop.f32.mrf.mxu0
        %v1655 = vpop.f32.mrf.mxu0
        %v1656 = vpop.f32.mrf.mxu0
        %1657 = vdwg.mxu0
        %v1658 = vld [vmem:[%s1057] sm:$0x1]
        %v1660 = vlaneseq
        %v1661 = vshrl.u32 %v1660, 7
        %v1662 = vsub.s32 0, %v1661
        %v1663 = vrot.slane %v1658, %v1662
        %v1665 = vmul.f32 %v1653, %v1663
        %v1682 = vunpack.c.l.b16 %v1538
        %v1683 = vunpack.c.l.b16 %v1539
        %v1684 = vunpack.c.l.b16 %v1540
        %v1685 = vunpack.c.l.b16 %v1541
        %v1686 = vunpack.c.l.b16 %v1542
        %v1687 = vunpack.c.l.b16 %v1543
        %v1688 = vunpack.c.l.b16 %v1544
        %v1689 = vunpack.c.l.b16 %v1545
        %v1690 = vunpack.c.l.b16 %v1546
        %v1691 = vunpack.c.l.b16 %v1547
        %v1692 = vunpack.c.l.b16 %v1548
        %v1693 = vunpack.c.l.b16 %v1549
        %v1694 = vunpack.c.l.b16 %v1550
        %v1695 = vunpack.c.l.b16 %v1551
        %v1696 = vunpack.c.l.b16 %v1552
        %v1697 = vunpack.c.l.b16 %v1553
        %v1698 = vpack.c.b16 %v1683, %v1682
        %v1699 = vpack.c.b16 %v1685, %v1684
        %v1700 = vpack.c.b16 %v1687, %v1686
        %v1701 = vpack.c.b16 %v1689, %v1688
        %v1702 = vpack.c.b16 %v1691, %v1690
        %v1703 = vpack.c.b16 %v1693, %v1692
        %v1704 = vpack.c.b16 %v1695, %v1694
        %v1705 = vpack.c.b16 %v1697, %v1696
        %1714 = vmatprep.subr.bf16.mxu0 0
        %1715 = vmatpush1.bf16.msra.mxu0 %v1705
        %1716 = vmatprep.subr.bf16.mxu0 0
        %1717 = vmatpush1.bf16.msra.mxu0 %v1704
        %1718 = vmatprep.subr.bf16.mxu0 0
        %1719 = vmatpush1.bf16.msra.mxu0 %v1703
        %1720 = vmatprep.subr.bf16.mxu0 0
        %1721 = vmatpush1.bf16.msra.mxu0 %v1702
        %1722 = vmatprep.subr.bf16.mxu0 0
        %1723 = vmatpush1.bf16.msra.mxu0 %v1701
        %1724 = vmatprep.subr.bf16.mxu0 0
        %1725 = vmatpush1.bf16.msra.mxu0 %v1700
        %1726 = vmatprep.subr.bf16.mxu0 0
        %1727 = vmatpush1.bf16.msra.mxu0 %v1699
        %1728 = vmatprep.subr.bf16.mxu0 0
        %1729 = vmatpush1.bf16.msra.mxu0 %v1698
        %1730 = vmatprep.subr.bf16.mxu0 0
        %1731 = vmatpush2.bf16.msra.mxu0 0
        %1732 = vmatprep.subr.bf16.mxu0 0
        %1733 = vmatpush2.bf16.msra.mxu0 0
        %1734 = vmatprep.subr.bf16.mxu0 0
        %1735 = vmatpush2.bf16.msra.mxu0 0
        %1736 = vmatprep.subr.bf16.mxu0 0
        %1737 = vmatpush2.bf16.msra.mxu0 0
        %1738 = vmatprep.subr.bf16.mxu0 0
        %1739 = vmatpush2.bf16.msra.mxu0 0
        %1740 = vmatprep.subr.bf16.mxu0 0
        %1741 = vmatpush2.bf16.msra.mxu0 0
        %1742 = vmatprep.subr.bf16.mxu0 0
        %1743 = vmatpush2.bf16.msra.mxu0 0
        %1744 = vmatprep.subr.bf16.mxu0 0
        %1745 = vmatpush2.bf16.msra.mxu0 0
        %1746 = vmatprep.mubr.bf16.mxu0 0
        %1747 = vmatmul.mubr.bf16.gmra.mxu0 %v1528
        %v1748 = vpop.f32.mrf.mxu0
        %v1749 = vadd.f32 %v1665, %v1748
        %v1750 = vpop.f32.mrf.mxu0
        %v1751 = vpop.f32.mrf.mxu0
        %v1752 = vpop.f32.mrf.mxu0
        %1753 = vdwg.mxu0
        %v1754 = vld [vmem:[%s1060] sm:$0x1]
        %v1756 = vlaneseq
        %v1757 = vshrl.u32 %v1756, 7
        %v1758 = vsub.s32 0, %v1757
        %v1759 = vrot.slane %v1754, %v1758
        %v1761 = vadd.f32 %v1749, %v1759
        %v1762 = vmax.f32 %v1761, 0.0
        %v1763 = vpack.c.bf16 %v1762, %v1762
        %v1764 = vld [vmem:[%s1063] sm:$0x1]
        %v1766 = vlaneseq
        %v1767 = vshrl.u32 %v1766, 7
        %v1768 = vsub.s32 0, %v1767
        %v1769 = vrot.slane %v1764, %v1768
        %v1771 = vmul.f32 %v1762, %v1769
        %v1772 = vpack.c.bf16 %v1771, %v1771
        %v1773 = vld [vmem:[%s909] sm:$0xf]
        %v1774 = vld [vmem:[%s909 + $0x4] sm:$0xf]
        %v1775 = vld [vmem:[%s909 + $0x8] sm:$0xf]
        %v1776 = vld [vmem:[%s909 + $0xc] sm:$0xf]
        %v1777 = vld [vmem:[%s909 + $0x10] sm:$0xf]
        %v1778 = vld [vmem:[%s909 + $0x14] sm:$0xf]
        %v1779 = vld [vmem:[%s909 + $0x18] sm:$0xf]
        %v1780 = vld [vmem:[%s909 + $0x1c] sm:$0xf]
        %v1781 = vld [vmem:[%s909 + $0x20] sm:$0xf]
        %v1782 = vld [vmem:[%s909 + $0x24] sm:$0xf]
        %v1783 = vld [vmem:[%s909 + $0x28] sm:$0xf]
        %v1784 = vld [vmem:[%s909 + $0x2c] sm:$0xf]
        %v1785 = vld [vmem:[%s909 + $0x30] sm:$0xf]
        %v1786 = vld [vmem:[%s909 + $0x34] sm:$0xf]
        %v1787 = vld [vmem:[%s909 + $0x38] sm:$0xf]
        %v1788 = vld [vmem:[%s909 + $0x3c] sm:$0xf]
        %v1789 = vld [vmem:[%s918] sm:$0xf]
        %v1790 = vld [vmem:[%s918 + $0x4] sm:$0xf]
        %v1791 = vld [vmem:[%s918 + $0x8] sm:$0xf]
        %v1792 = vld [vmem:[%s918 + $0xc] sm:$0xf]
        %v1793 = vld [vmem:[%s918 + $0x10] sm:$0xf]
        %v1794 = vld [vmem:[%s918 + $0x14] sm:$0xf]
        %v1795 = vld [vmem:[%s918 + $0x18] sm:$0xf]
        %v1796 = vld [vmem:[%s918 + $0x1c] sm:$0xf]
        %v1797 = vld [vmem:[%s918 + $0x20] sm:$0xf]
        %v1798 = vld [vmem:[%s918 + $0x24] sm:$0xf]
        %v1799 = vld [vmem:[%s918 + $0x28] sm:$0xf]
        %v1800 = vld [vmem:[%s918 + $0x2c] sm:$0xf]
        %v1801 = vld [vmem:[%s918 + $0x30] sm:$0xf]
        %v1802 = vld [vmem:[%s918 + $0x34] sm:$0xf]
        %v1803 = vld [vmem:[%s918 + $0x38] sm:$0xf]
        %v1804 = vld [vmem:[%s918 + $0x3c] sm:$0xf]
        %v1821 = vunpack.c.l.b16 %v1789
        %v1822 = vunpack.c.l.b16 %v1790
        %v1823 = vunpack.c.l.b16 %v1791
        %v1824 = vunpack.c.l.b16 %v1792
        %v1825 = vunpack.c.l.b16 %v1793
        %v1826 = vunpack.c.l.b16 %v1794
        %v1827 = vunpack.c.l.b16 %v1795
        %v1828 = vunpack.c.l.b16 %v1796
        %v1829 = vunpack.c.l.b16 %v1797
        %v1830 = vunpack.c.l.b16 %v1798
        %v1831 = vunpack.c.l.b16 %v1799
        %v1832 = vunpack.c.l.b16 %v1800
        %v1833 = vunpack.c.l.b16 %v1801
        %v1834 = vunpack.c.l.b16 %v1802
        %v1835 = vunpack.c.l.b16 %v1803
        %v1836 = vunpack.c.l.b16 %v1804
        %v1837 = vpack.c.b16 %v1822, %v1821
        %v1838 = vpack.c.b16 %v1824, %v1823
        %v1839 = vpack.c.b16 %v1826, %v1825
        %v1840 = vpack.c.b16 %v1828, %v1827
        %v1841 = vpack.c.b16 %v1830, %v1829
        %v1842 = vpack.c.b16 %v1832, %v1831
        %v1843 = vpack.c.b16 %v1834, %v1833
        %v1844 = vpack.c.b16 %v1836, %v1835
        %1853 = vmatprep.subr.bf16.mxu0 0
        %1854 = vmatpush1.bf16.msra.mxu0 %v1844
        %1855 = vmatprep.subr.bf16.mxu0 0
        %1856 = vmatpush1.bf16.msra.mxu0 %v1843
        %1857 = vmatprep.subr.bf16.mxu0 0
        %1858 = vmatpush1.bf16.msra.mxu0 %v1842
        %1859 = vmatprep.subr.bf16.mxu0 0
        %1860 = vmatpush1.bf16.msra.mxu0 %v1841
        %1861 = vmatprep.subr.bf16.mxu0 0
        %1862 = vmatpush1.bf16.msra.mxu0 %v1840
        %1863 = vmatprep.subr.bf16.mxu0 0
        %1864 = vmatpush1.bf16.msra.mxu0 %v1839
        %1865 = vmatprep.subr.bf16.mxu0 0
        %1866 = vmatpush1.bf16.msra.mxu0 %v1838
        %1867 = vmatprep.subr.bf16.mxu0 0
        %1868 = vmatpush1.bf16.msra.mxu0 %v1837
        %1869 = vmatprep.subr.bf16.mxu0 0
        %1870 = vmatpush2.bf16.msra.mxu0 0
        %1871 = vmatprep.subr.bf16.mxu0 0
        %1872 = vmatpush2.bf16.msra.mxu0 0
        %1873 = vmatprep.subr.bf16.mxu0 0
        %1874 = vmatpush2.bf16.msra.mxu0 0
        %1875 = vmatprep.subr.bf16.mxu0 0
        %1876 = vmatpush2.bf16.msra.mxu0 0
        %1877 = vmatprep.subr.bf16.mxu0 0
        %1878 = vmatpush2.bf16.msra.mxu0 0
        %1879 = vmatprep.subr.bf16.mxu0 0
        %1880 = vmatpush2.bf16.msra.mxu0 0
        %1881 = vmatprep.subr.bf16.mxu0 0
        %1882 = vmatpush2.bf16.msra.mxu0 0
        %1883 = vmatprep.subr.bf16.mxu0 0
        %1884 = vmatpush2.bf16.msra.mxu0 0
        %1885 = vmatprep.mubr.bf16.mxu0 0
        %1886 = vmatmul.mubr.bf16.gmra.mxu0 %v1772
        %v1887 = vpop.f32.mrf.mxu0
        %v1888 = vadd.f32 0.0, %v1887
        %v1889 = vpop.f32.mrf.mxu0
        %v1890 = vpop.f32.mrf.mxu0
        %v1891 = vpop.f32.mrf.mxu0
        %1892 = vdwg.mxu0
        %v1893 = vld [vmem:[%s1066] sm:$0x1]
        %v1895 = vlaneseq
        %v1896 = vshrl.u32 %v1895, 7
        %v1897 = vsub.s32 0, %v1896
        %v1898 = vrot.slane %v1893, %v1897
        %v1900 = vmul.f32 %v1888, %v1898
        %v1917 = vunpack.c.l.b16 %v1773
        %v1918 = vunpack.c.l.b16 %v1774
        %v1919 = vunpack.c.l.b16 %v1775
        %v1920 = vunpack.c.l.b16 %v1776
        %v1921 = vunpack.c.l.b16 %v1777
        %v1922 = vunpack.c.l.b16 %v1778
        %v1923 = vunpack.c.l.b16 %v1779
        %v1924 = vunpack.c.l.b16 %v1780
        %v1925 = vunpack.c.l.b16 %v1781
        %v1926 = vunpack.c.l.b16 %v1782
        %v1927 = vunpack.c.l.b16 %v1783
        %v1928 = vunpack.c.l.b16 %v1784
        %v1929 = vunpack.c.l.b16 %v1785
        %v1930 = vunpack.c.l.b16 %v1786
        %v1931 = vunpack.c.l.b16 %v1787
        %v1932 = vunpack.c.l.b16 %v1788
        %v1933 = vpack.c.b16 %v1918, %v1917
        %v1934 = vpack.c.b16 %v1920, %v1919
        %v1935 = vpack.c.b16 %v1922, %v1921
        %v1936 = vpack.c.b16 %v1924, %v1923
        %v1937 = vpack.c.b16 %v1926, %v1925
        %v1938 = vpack.c.b16 %v1928, %v1927
        %v1939 = vpack.c.b16 %v1930, %v1929
        %v1940 = vpack.c.b16 %v1932, %v1931
        %1949 = vmatprep.subr.bf16.mxu0 0
        %1950 = vmatpush1.bf16.msra.mxu0 %v1940
        %1951 = vmatprep.subr.bf16.mxu0 0
        %1952 = vmatpush1.bf16.msra.mxu0 %v1939
        %1953 = vmatprep.subr.bf16.mxu0 0
        %1954 = vmatpush1.bf16.msra.mxu0 %v1938
        %1955 = vmatprep.subr.bf16.mxu0 0
        %1956 = vmatpush1.bf16.msra.mxu0 %v1937
        %1957 = vmatprep.subr.bf16.mxu0 0
        %1958 = vmatpush1.bf16.msra.mxu0 %v1936
        %1959 = vmatprep.subr.bf16.mxu0 0
        %1960 = vmatpush1.bf16.msra.mxu0 %v1935
        %1961 = vmatprep.subr.bf16.mxu0 0
        %1962 = vmatpush1.bf16.msra.mxu0 %v1934
        %1963 = vmatprep.subr.bf16.mxu0 0
        %1964 = vmatpush1.bf16.msra.mxu0 %v1933
        %1965 = vmatprep.subr.bf16.mxu0 0
        %1966 = vmatpush2.bf16.msra.mxu0 0
        %1967 = vmatprep.subr.bf16.mxu0 0
        %1968 = vmatpush2.bf16.msra.mxu0 0
        %1969 = vmatprep.subr.bf16.mxu0 0
        %1970 = vmatpush2.bf16.msra.mxu0 0
        %1971 = vmatprep.subr.bf16.mxu0 0
        %1972 = vmatpush2.bf16.msra.mxu0 0
        %1973 = vmatprep.subr.bf16.mxu0 0
        %1974 = vmatpush2.bf16.msra.mxu0 0
        %1975 = vmatprep.subr.bf16.mxu0 0
        %1976 = vmatpush2.bf16.msra.mxu0 0
        %1977 = vmatprep.subr.bf16.mxu0 0
        %1978 = vmatpush2.bf16.msra.mxu0 0
        %1979 = vmatprep.subr.bf16.mxu0 0
        %1980 = vmatpush2.bf16.msra.mxu0 0
        %1981 = vmatprep.mubr.bf16.mxu0 0
        %1982 = vmatmul.mubr.bf16.gmra.mxu0 %v1763
        %v1983 = vpop.f32.mrf.mxu0
        %v1984 = vadd.f32 %v1900, %v1983
        %v1985 = vpop.f32.mrf.mxu0
        %v1986 = vpop.f32.mrf.mxu0
        %v1987 = vpop.f32.mrf.mxu0
        %1988 = vdwg.mxu0
        %v1989 = vld [vmem:[%s1069] sm:$0x1]
        %v1991 = vlaneseq
        %v1992 = vshrl.u32 %v1991, 7
        %v1993 = vsub.s32 0, %v1992
        %v1994 = vrot.slane %v1989, %v1993
        %v1996 = vadd.f32 %v1984, %v1994
        %p1997 = scmp.eq.s32.totalorder %s36, 0
        // Predicated region
        $region141: #{tpu_custom_call.1} parent=99 // pred_check
          %p1998 = pneg %p1997
        $region142: #{tpu_custom_call.1} parent=99 // pred_check_branch
          %2000 = sbr.rel (%p1998) target = $region144
        $region143: #{tpu_custom_call.1} parent=99 // pred_region
          %2001 = vst [vmem:[%s1039] sm:$0xff] %v1996
        $region144: #{tpu_custom_call.1} parent=99 // pred_fallthru
          _
        %p2002 = scmp.eq.s32.totalorder %s36, 1
        // Predicated region
        $region145: #{tpu_custom_call.1} parent=99 // pred_check
          %p2003 = pneg %p2002
        $region146: #{tpu_custom_call.1} parent=99 // pred_check_branch
          %2005 = sbr.rel (%p2003) target = $region148
        $region147: #{tpu_custom_call.1} parent=99 // pred_region
          %v2006 = vmax.f32 %v1996, 0.0
          %v2007 = vand.u32 2147483647, %v1996
          %v2008 = vsub.f32 0.0, %v2007
          %v2009 = vmul.f32 %v2008, 1.442695
          %v2010 = vpow.pop %v2009
          %v2011 = vadd.f32 %v2010, 1.0
          %v2012 = vlog2.pop %v2011
          %v2013 = vmul.f32 %v2012, 0.6931472
          %v2014 = vadd.f32 %v2006, %v2013
          %v2015 = vadd.f32 %v2014, 1e-06
          %2016 = vst [vmem:[%s1039] sm:$0xff] %v2015
        $region148: #{tpu_custom_call.1} parent=99 // pred_fallthru
          _
        %s2017 = sand.u32 %s554, 1
        %s2018 = scalar_lea.sflag [#allocation4], %s2017
        %s2019 = sand.u32 %s554, 1
        %s2020 = smul.addr %s2019, 8
        %s2021 = scalar_lea.vmem [#allocation15], %s2020
        // Predicated region
        $region149: #{tpu_custom_call.1} parent=99 // pred_check
          %p2022 = pneg %p564
        $region150: #{tpu_custom_call.1} parent=99 // pred_check_branch
          %2024 = sbr.rel (%p2022) target = $region152
        $region151: #{tpu_custom_call.1} parent=99 // pred_region
          %s2026 = ssub.s32 128, 128
          %2027 = vsyncadd %s2018, %s2026
          %s2028 = smul.addr %s36, 128
          %s2029 = scalar_lea.hbm %s20, %s2028
          %s2031 = sshll.u32 %s2021, 4
          %s2032 = int_to_ptr.vmem [resolvable:$true] %s2031
          %2034 = dma.vmem_to_hbm [thread:$0]  %s2032, 128, %s2029, %s2018
        $region152: #{tpu_custom_call.1} parent=99 // pred_fallthru
          _
      $region100: #{tpu_custom_call.1} parent=5 // pred_fallthru
        _
      %p2035 = scmp.le.s32.totalorder 2, %s31
      // Predicated region
      $region153: #{tpu_custom_call.1} parent=5 // pred_check
        %p2036 = pneg %p2035
      $region154: #{tpu_custom_call.1} parent=5 // pred_check_branch
        %2038 = sbr.rel (%p2036) target = $region156
      $region155: #{tpu_custom_call.1} parent=5 // pred_region
        %s2039 = ssub.s32 %s31, 2
        // Predicated region
        $region157: #{tpu_custom_call.1} parent=155 // pred_check
          %p2040 = pneg %p570
        $region158: #{tpu_custom_call.1} parent=155 // pred_check_branch
          %2042 = sbr.rel (%p2040) target = $region160
        $region159: #{tpu_custom_call.1} parent=155 // pred_region
          %s2043 = sand.u32 %s555, 1
          %s2044 = scalar_lea.sflag [#allocation4], %s2043
          %s2045 = sand.u32 %s555, 1
          %s2046 = smul.addr %s2045, 8
          %s2047 = scalar_lea.vmem [#allocation15], %s2046
          %2048 = dma.done %s2044, 128
        $region160: #{tpu_custom_call.1} parent=155 // pred_fallthru
          _
      $region156: #{tpu_custom_call.1} parent=5 // pred_fallthru
        _
    $region6: #{tpu_custom_call.1} parent=1 // loop_footer
      %s35 = sadd.s32 1, %s31
    $region7: #{tpu_custom_call.1} parent=1 // loop_footer_branch
      %30 = sbr.rel target = $region3
    $region8: #{tpu_custom_call.1} parent=1 // loop_exit
      _
    %2049 = vsyncpa [#allocation3], 1
    %s2050 = scalar_lea.sflag [#allocation3], 1
    %2051 = vsyncpa %s2050, 1
    %2052 = vsyncpa [#allocation6], 1
    %2053 = vsyncpa [#allocation4], 1
    %s2054 = scalar_lea.sflag [#allocation4], 1
    %2055 = vsyncpa %s2054, 1

</llo_original>
